<compile_context>
chip_gen: v7x
topology: tpu7x:2x2x1
jax: 0.10.0
libtpu: 0.0.40
codegen_flags: <defaults>
</compile_context>

<pallas_src>
import jax
import jax.numpy as jnp
from jax.experimental import pallas as pl
from jax.experimental.pallas import tpu as pltpu


MAX_NORM = 1.0
RENORM_EPS = 1e-7  # torch.embedding_renorm_ uses max_norm / (norm + 1e-7)
TILE = 128         # indices per grid step (multiple of 8 for sublane alignment)


def _gather_renorm_kernel(idx_ref, w_ref, out_ref):
    # idx_ref: (TILE, 1) int32  -- indices handled by this grid step
    # w_ref:   (N_pad, D)       -- full embedding table, resident in VMEM
    # out_ref: (TILE, D)
    t = out_ref.shape[0]
    n = w_ref.shape[0]

    idx = idx_ref[...]                                            # (T, 1) int32
    node_ids = jax.lax.broadcasted_iota(jnp.int32, (t, n), 1)     # (T, N)
    onehot = (node_ids == idx).astype(jnp.float32)                # (T, N) 0/1

    # MXU gather: one-hot matmul selects the rows. HIGHEST precision keeps the
    # f32 rows bit-exact (no bf16 rounding on the pass decomposition).
    rows = jnp.dot(
        onehot,
        w_ref[...],
        preferred_element_type=jnp.float32,
        precision=jax.lax.Precision.HIGHEST,
    )                                                             # (T, D) f32

    # L2 renorm to max_norm=1 (scale only rows whose norm exceeds MAX_NORM).
    sq_sum = jnp.sum(rows * rows, axis=-1, keepdims=True)         # (T, 1)
    norm = jnp.sqrt(sq_sum)
    # pl.reciprocal (exact mode) keeps the divide off the hot VPU path.
    scale = jnp.where(norm > MAX_NORM,
                      MAX_NORM * pl.reciprocal(norm + RENORM_EPS),
                      jnp.float32(1.0))
    out_ref[...] = (rows * scale).astype(out_ref.dtype)


def node_embeddings_forward(weight, node_idx, *, tile=TILE):
    """Gather + max_norm(=1) renormalization.

    weight:   [num_nodes, D] float32 embedding table
    node_idx: int array of any shape
    returns:  node_idx.shape + (D,) float32
    """
    num_nodes, emb_dim = weight.shape
    node_idx = jnp.asarray(node_idx)
    idx_flat = node_idx.reshape(-1).astype(jnp.int32)
    n_idx = idx_flat.shape[0]

    if n_idx == 0:  # zero-sized grid guard
        return jnp.zeros(tuple(node_idx.shape) + (emb_dim,), dtype=weight.dtype)

    # Guard against out-of-range indices (PyTorch would raise; a Pallas gather
    # would silently read junk). Clamp into range.
    idx_flat = jnp.clip(idx_flat, 0, num_nodes - 1)

    # Pad the index list to a whole number of tiles.
    n_blocks = pl.cdiv(n_idx, tile)
    n_pad = n_blocks * tile
    if n_pad != n_idx:
        idx_flat = jnp.pad(idx_flat, (0, n_pad - n_idx))
    idx_col = idx_flat.reshape(n_pad, 1)

    # Pad table rows to a multiple of 128 so the one-hot operand is lane-dense
    # and the MXU contraction dim is aligned. Padded rows are never selected.
    rows_pad = ((num_nodes + 127) // 128) * 128
    if rows_pad != num_nodes:
        weight_p = jnp.pad(weight, ((0, rows_pad - num_nodes), (0, 0)))
    else:
        weight_p = weight

    table_bytes = rows_pad * emb_dim * weight.dtype.itemsize
    # Resident-table fast path: table + double-buffered (tile, D) in/out tiles
    # must fit VMEM. 24 MiB cap leaves headroom even on v7x (64 MiB physical).
    assert table_bytes <= 24 * 1024 * 1024, (
        "TODO(synk): table too large for resident-VMEM path; tile along D or "
        "use a manual double-buffered row-gather (memory_space=pl.ANY + "
        "make_async_copy).")
    vmem_limit = int(min(table_bytes + 8 * tile * emb_dim * 4 + (4 << 20),
                         64 << 20))

    out = pl.pallas_call(
        _gather_renorm_kernel,
        out_shape=jax.ShapeDtypeStruct((n_pad, emb_dim), weight.dtype),
        grid_spec=pl.GridSpec(
            grid=(n_blocks,),
            in_specs=[
                # TILE indices for this step (last dim == full dim 1).
                pl.BlockSpec((tile, 1), lambda i: (i, 0)),
                # Full table, block index constant -> DMA'd once, stays in VMEM.
                pl.BlockSpec((rows_pad, emb_dim), lambda i: (0, 0)),
            ],
            out_specs=pl.BlockSpec((tile, emb_dim), lambda i: (i, 0)),
        ),
        compiler_params=pltpu.CompilerParams(
            dimension_semantics=("parallel",),   # independent tiles -> megacore
            vmem_limit_bytes=vmem_limit,
        ),
    )(idx_col, weight_p)

    out = out[:n_idx]
    return out.reshape(tuple(node_idx.shape) + (emb_dim,))


def _reference_forward(weight, node_idx):
    rows = weight[node_idx.reshape(-1)]
    norm = jnp.linalg.norm(rows, axis=-1, keepdims=True)
    scale = jnp.where(norm > MAX_NORM, MAX_NORM / (norm + RENORM_EPS), 1.0)
    return (rows * scale).reshape(tuple(node_idx.shape) + (weight.shape[-1],))


if __name__ == "__main__":
    # Small shapes consistent with the module (embedding_dim default = 200).
    num_nodes = 64
    embedding_dim = 200

    key = jax.random.PRNGKey(0)
    kw, ki = jax.random.split(key)

    # nn.Embedding default init ~ N(0, 1); deterministic via PRNGKey(0).
    weight = jax.random.normal(kw, (num_nodes, embedding_dim), dtype=jnp.float32)
    # Make one row already inside the max_norm ball to exercise both branches.
    weight = weight.at[3].set(weight[3] * 0.001)

    node_idx = jax.random.randint(ki, (10,), 0, num_nodes, dtype=jnp.int32)
    node_idx = node_idx.at[0].set(3)                 # "no rescale" branch
    node_idx = node_idx.at[1].set(node_idx[2])       # repeated index

    out = jax.block_until_ready(node_embeddings_forward(weight, node_idx))
    ref = _reference_forward(weight, node_idx)

    assert out.shape == (10, embedding_dim)
    assert jnp.allclose(out, ref, atol=1e-5, rtol=1e-5), "mismatch vs reference"

    print("KERNEL_OK")
</pallas_src>

<mosaic_0001>
module attributes {stable_mosaic.version = 11 : i64} {
  func.func @_gather_renorm_kernel(%arg0: i32, %arg1: memref<128x1xi32, #tpu.memory_space<vmem>>, %arg2: memref<128x200xf32, #tpu.memory_space<vmem>>, %arg3: memref<128x200xf32, #tpu.memory_space<vmem>>) attributes {dimension_semantics = [#tpu.dimension_semantics<parallel>], iteration_bounds = array<i64: 1>, scalar_prefetch = 0 : i64, scratch_operands = 0 : i64, tpu.core_type = #tpu.core_type<tc>, window_params = [{transform_indices = @transform_0, window_bounds = array<i64: 128, 1>}, {pipeline_mode = #tpu.pipeline_mode<synchronous>, transform_indices = @transform_1, window_bounds = array<i64: 128, 200>}, {transform_indices = @transform_2, window_bounds = array<i64: 128, 200>}]} {
    %c0 = arith.constant 0 : index
    %c0_0 = arith.constant 0 : index
    %0 = vector.load %arg1[%c0, %c0_0] : memref<128x1xi32, #tpu.memory_space<vmem>>, vector<128x1xi32>
    %1 = tpu.iota {dimensions = array<i32: 1>} : vector<128x128xi32>
    %2 = vector.broadcast %0 : vector<128x1xi32> to vector<128x128xi32>
    %3 = arith.cmpi eq, %1, %2 : vector<128x128xi32>
    %4 = arith.extui %3 : vector<128x128xi1> to vector<128x128xi32>
    %5 = arith.sitofp %4 : vector<128x128xi32> to vector<128x128xf32>
    %c0_1 = arith.constant 0 : index
    %c0_2 = arith.constant 0 : index
    %6 = vector.load %arg2[%c0_1, %c0_2] : memref<128x200xf32, #tpu.memory_space<vmem>>, vector<128x200xf32>
    %cst = arith.constant dense<0.000000e+00> : vector<128x200xf32>
    %7 = tpu.matmul %5, %6, %cst {dimension_numbers = #tpu.dot_dimension_numbers<[1], [0], [0], [1], [0, 0, 1, 1], [], []>, precision = #tpu.contract_precision<fp32>} : vector<128x128xf32>, vector<128x200xf32>, vector<128x200xf32> -> vector<128x200xf32>
    %8 = arith.mulf %7, %7 : vector<128x200xf32>
    %cst_3 = arith.constant dense<0.000000e+00> : vector<128xf32>
    %9 = vector.multi_reduction <add>, %8, %cst_3 [1] : vector<128x200xf32> to vector<128xf32>
    %10 = vector.shape_cast %9 : vector<128xf32> to vector<128x1xf32>
    %11 = math.sqrt %10 : vector<128x1xf32>
    %cst_4 = arith.constant 1.000000e+00 : f32
    %12 = vector.broadcast %cst_4 : f32 to vector<128x1xf32>
    %13 = arith.cmpf ogt, %11, %12 : vector<128x1xf32>
    %cst_5 = arith.constant 1.000000e-07 : f32
    %14 = vector.broadcast %cst_5 : f32 to vector<128x1xf32>
    %15 = arith.addf %11, %14 : vector<128x1xf32>
    %16 = tpu.reciprocal %15 : vector<128x1xf32> -> vector<128x1xf32>
    %cst_6 = arith.constant 1.000000e+00 : f32
    %17 = vector.broadcast %cst_6 : f32 to vector<128x1xf32>
    %18 = arith.mulf %17, %16 : vector<128x1xf32>
    %cst_7 = arith.constant 1.000000e+00 : f32
    %19 = vector.broadcast %cst_7 : f32 to vector<128x1xf32>
    %20 = arith.select %13, %18, %19 : vector<128x1xi1>, vector<128x1xf32>
    %21 = vector.broadcast %20 : vector<128x1xf32> to vector<128x200xf32>
    %22 = arith.mulf %7, %21 : vector<128x200xf32>
    %c0_8 = arith.constant 0 : index
    %c0_9 = arith.constant 0 : index
    %23 = vector.load %arg3[%c0_8, %c0_9] : memref<128x200xf32, #tpu.memory_space<vmem>>, vector<128x200xf32>
    tpu.vector_store %arg3[%c0_8, %c0_9], %22 {strides = array<i32>} : memref<128x200xf32, #tpu.memory_space<vmem>>, vector<128x200xf32>,
    return
  }
  func.func @transform_0(%arg0: i32) -> (i32, i32) {
    %c0_i32 = arith.constant 0 : i32
    %c0_i32_0 = arith.constant 0 : i32
    return %arg0, %c0_i32 : i32, i32
  }
  func.func @transform_1(%arg0: i32) -> (i32, i32) {
    %c0_i32 = arith.constant 0 : i32
    %c0_i32_0 = arith.constant 0 : i32
    %c0_i32_1 = arith.constant 0 : i32
    return %c0_i32, %c0_i32_0 : i32, i32
  }
  func.func @transform_2(%arg0: i32) -> (i32, i32) {
    %c0_i32 = arith.constant 0 : i32
    %c0_i32_0 = arith.constant 0 : i32
    return %arg0, %c0_i32 : i32, i32
  }
}

</mosaic_0001>

<llo_original>
// kernel: tpu_custom_call.1
$region0: #{tpu_custom_call.1}
  #allocation0 [shape = 'u32[]', space=smem, size = 0x4, offset = 0x4, fixed_abs, tag = 'smem constant byte address 0x4 - core index']
  #allocation1 [shape = 'u32[144,128]{1,0:T(1,128)}', space=vmem, size = 0x12000, scoped, tag = 'internal scratch']
  %s0 = inlined_call_operand.vmem [shape: s32[128,1], index: 0, kind: input, shape index: {}]
  %s1 = inlined_call_operand.vmem [shape: f32[128,200], index: 1, kind: input, shape index: {}]
  %s2 = inlined_call_operand.vmem [shape: f32[128,200], index: 2, kind: output, shape index: {}]
  %s3 = sld [smem:[#allocation0]]
  $region18: #{tpu_custom_call.1} parent=0
    _
  %s5 = ssub.s32 1, %s3
  %s6 = scalar_select 0, %s5, %s3
  // Predicated region
  $region2: #{tpu_custom_call.1} parent=0 // pred_check
    _
  $region3: #{tpu_custom_call.1} parent=0 // pred_check_branch
    %8 = sbr.rel (0) target = $region5
  $region4: #{tpu_custom_call.1} parent=0 // pred_region
    _
  $region5: #{tpu_custom_call.1} parent=0 // pred_fallthru
    _
  // Predicated region
  $region6: #{tpu_custom_call.1} parent=0 // pred_check
    _
  $region7: #{tpu_custom_call.1} parent=0 // pred_check_branch
    %10 = sbr.rel (0) target = $region9
  $region8: #{tpu_custom_call.1} parent=0 // pred_region
    _
  $region9: #{tpu_custom_call.1} parent=0 // pred_fallthru
    _
  %v11 = vld [vmem:[%s0] sm:$0xff]
  %v12 = vld [vmem:[%s0 + $0x8] sm:$0xff]
  %v13 = vld [vmem:[%s0 + $0x10] sm:$0xff]
  %v14 = vld [vmem:[%s0 + $0x18] sm:$0xff]
  %v15 = vld [vmem:[%s0 + $0x20] sm:$0xff]
  %v16 = vld [vmem:[%s0 + $0x28] sm:$0xff]
  %v17 = vld [vmem:[%s0 + $0x30] sm:$0xff]
  %v18 = vld [vmem:[%s0 + $0x38] sm:$0xff]
  %v19 = vld [vmem:[%s0 + $0x40] sm:$0xff]
  %v20 = vld [vmem:[%s0 + $0x48] sm:$0xff]
  %v21 = vld [vmem:[%s0 + $0x50] sm:$0xff]
  %v22 = vld [vmem:[%s0 + $0x58] sm:$0xff]
  %v23 = vld [vmem:[%s0 + $0x60] sm:$0xff]
  %v24 = vld [vmem:[%s0 + $0x68] sm:$0xff]
  %v25 = vld [vmem:[%s0 + $0x70] sm:$0xff]
  %v26 = vld [vmem:[%s0 + $0x78] sm:$0xff]
  %v27 = vlaneseq
  %v28 = vand.u32 %v27, 127
  %29 = vset.pattern.permute.xlu0 0
  %30 = vperm.xlu0 %29, %v11
  %v31 = vpop.permute.xlu0 %30
  %32 = vset.pattern.permute.xlu0 0
  %33 = vperm.xlu0 %32, %v12
  %v34 = vpop.permute.xlu0 %33
  %35 = vset.pattern.permute.xlu0 0
  %36 = vperm.xlu0 %35, %v13
  %v37 = vpop.permute.xlu0 %36
  %38 = vset.pattern.permute.xlu0 0
  %39 = vperm.xlu0 %38, %v14
  %v40 = vpop.permute.xlu0 %39
  %41 = vset.pattern.permute.xlu0 0
  %42 = vperm.xlu0 %41, %v15
  %v43 = vpop.permute.xlu0 %42
  %44 = vset.pattern.permute.xlu0 0
  %45 = vperm.xlu0 %44, %v16
  %v46 = vpop.permute.xlu0 %45
  %47 = vset.pattern.permute.xlu0 0
  %48 = vperm.xlu0 %47, %v17
  %v49 = vpop.permute.xlu0 %48
  %50 = vset.pattern.permute.xlu0 0
  %51 = vperm.xlu0 %50, %v18
  %v52 = vpop.permute.xlu0 %51
  %53 = vset.pattern.permute.xlu0 0
  %54 = vperm.xlu0 %53, %v19
  %v55 = vpop.permute.xlu0 %54
  %56 = vset.pattern.permute.xlu0 0
  %57 = vperm.xlu0 %56, %v20
  %v58 = vpop.permute.xlu0 %57
  %59 = vset.pattern.permute.xlu0 0
  %60 = vperm.xlu0 %59, %v21
  %v61 = vpop.permute.xlu0 %60
  %62 = vset.pattern.permute.xlu0 0
  %63 = vperm.xlu0 %62, %v22
  %v64 = vpop.permute.xlu0 %63
  %65 = vset.pattern.permute.xlu0 0
  %66 = vperm.xlu0 %65, %v23
  %v67 = vpop.permute.xlu0 %66
  %68 = vset.pattern.permute.xlu0 0
  %69 = vperm.xlu0 %68, %v24
  %v70 = vpop.permute.xlu0 %69
  %71 = vset.pattern.permute.xlu0 0
  %72 = vperm.xlu0 %71, %v25
  %v73 = vpop.permute.xlu0 %72
  %74 = vset.pattern.permute.xlu0 0
  %75 = vperm.xlu0 %74, %v26
  %v76 = vpop.permute.xlu0 %75
  %vm77 = vcmp.eq.s32.totalorder %v28, %v31
  %vm78 = vcmp.eq.s32.totalorder %v28, %v34
  %vm79 = vcmp.eq.s32.totalorder %v28, %v37
  %vm80 = vcmp.eq.s32.totalorder %v28, %v40
  %vm81 = vcmp.eq.s32.totalorder %v28, %v43
  %vm82 = vcmp.eq.s32.totalorder %v28, %v46
  %vm83 = vcmp.eq.s32.totalorder %v28, %v49
  %vm84 = vcmp.eq.s32.totalorder %v28, %v52
  %vm85 = vcmp.eq.s32.totalorder %v28, %v55
  %vm86 = vcmp.eq.s32.totalorder %v28, %v58
  %vm87 = vcmp.eq.s32.totalorder %v28, %v61
  %vm88 = vcmp.eq.s32.totalorder %v28, %v64
  %vm89 = vcmp.eq.s32.totalorder %v28, %v67
  %vm90 = vcmp.eq.s32.totalorder %v28, %v70
  %vm91 = vcmp.eq.s32.totalorder %v28, %v73
  %vm92 = vcmp.eq.s32.totalorder %v28, %v76
  %v93 = vsel %vm77, 1, 0
  %v94 = vsel %vm78, 1, 0
  %v95 = vsel %vm79, 1, 0
  %v96 = vsel %vm80, 1, 0
  %v97 = vsel %vm81, 1, 0
  %v98 = vsel %vm82, 1, 0
  %v99 = vsel %vm83, 1, 0
  %v100 = vsel %vm84, 1, 0
  %v101 = vsel %vm85, 1, 0
  %v102 = vsel %vm86, 1, 0
  %v103 = vsel %vm87, 1, 0
  %v104 = vsel %vm88, 1, 0
  %v105 = vsel %vm89, 1, 0
  %v106 = vsel %vm90, 1, 0
  %v107 = vsel %vm91, 1, 0
  %v108 = vsel %vm92, 1, 0
  %v109 = vcvt.s32.f32 %v93
  %v110 = vcvt.s32.f32 %v94
  %v111 = vcvt.s32.f32 %v95
  %v112 = vcvt.s32.f32 %v96
  %v113 = vcvt.s32.f32 %v97
  %v114 = vcvt.s32.f32 %v98
  %v115 = vcvt.s32.f32 %v99
  %v116 = vcvt.s32.f32 %v100
  %v117 = vcvt.s32.f32 %v101
  %v118 = vcvt.s32.f32 %v102
  %v119 = vcvt.s32.f32 %v103
  %v120 = vcvt.s32.f32 %v104
  %v121 = vcvt.s32.f32 %v105
  %v122 = vcvt.s32.f32 %v106
  %v123 = vcvt.s32.f32 %v107
  %v124 = vcvt.s32.f32 %v108
  %v125 = vld [vmem:[%s1] sm:$0xff]
  %v126 = vld [vmem:[%s1 + $0x8] sm:$0xff]
  %v127 = vld [vmem:[%s1 + $0x10] sm:$0xff]
  %v128 = vld [vmem:[%s1 + $0x18] sm:$0xff]
  %v129 = vld [vmem:[%s1 + $0x20] sm:$0xff]
  %v130 = vld [vmem:[%s1 + $0x28] sm:$0xff]
  %v131 = vld [vmem:[%s1 + $0x30] sm:$0xff]
  %v132 = vld [vmem:[%s1 + $0x38] sm:$0xff]
  %v133 = vld [vmem:[%s1 + $0x40] sm:$0xff]
  %v134 = vld [vmem:[%s1 + $0x48] sm:$0xff]
  %v135 = vld [vmem:[%s1 + $0x50] sm:$0xff]
  %v136 = vld [vmem:[%s1 + $0x58] sm:$0xff]
  %v137 = vld [vmem:[%s1 + $0x60] sm:$0xff]
  %v138 = vld [vmem:[%s1 + $0x68] sm:$0xff]
  %v139 = vld [vmem:[%s1 + $0x70] sm:$0xff]
  %v140 = vld [vmem:[%s1 + $0x78] sm:$0xff]
  %v141 = vld [vmem:[%s1 + $0x80] sm:$0xff]
  %v142 = vld [vmem:[%s1 + $0x88] sm:$0xff]
  %v143 = vld [vmem:[%s1 + $0x90] sm:$0xff]
  %v144 = vld [vmem:[%s1 + $0x98] sm:$0xff]
  %v145 = vld [vmem:[%s1 + $0xa0] sm:$0xff]
  %v146 = vld [vmem:[%s1 + $0xa8] sm:$0xff]
  %v147 = vld [vmem:[%s1 + $0xb0] sm:$0xff]
  %v148 = vld [vmem:[%s1 + $0xb8] sm:$0xff]
  %v149 = vld [vmem:[%s1 + $0xc0] sm:$0xff]
  %v150 = vld [vmem:[%s1 + $0xc8] sm:$0xff]
  %v151 = vld [vmem:[%s1 + $0xd0] sm:$0xff]
  %v152 = vld [vmem:[%s1 + $0xd8] sm:$0xff]
  %v153 = vld [vmem:[%s1 + $0xe0] sm:$0xff]
  %v154 = vld [vmem:[%s1 + $0xe8] sm:$0xff]
  %v155 = vld [vmem:[%s1 + $0xf0] sm:$0xff]
  %v156 = vld [vmem:[%s1 + $0xf8] sm:$0xff]
  %v157 = vand.u32 %v126, 4294901760
  %158 = vmatprep.subr.mxu0 %v157
  %v159 = vand.u32 %v125, 4294901760
  %160 = vmatpush1.msra.mxu0 %v159
  %v161 = vand.u32 %v128, 4294901760
  %162 = vmatprep.subr.mxu0 %v161
  %v163 = vand.u32 %v127, 4294901760
  %164 = vmatpush1.msra.mxu0 %v163
  %v165 = vand.u32 %v130, 4294901760
  %166 = vmatprep.subr.mxu0 %v165
  %v167 = vand.u32 %v129, 4294901760
  %168 = vmatpush1.msra.mxu0 %v167
  %v169 = vand.u32 %v132, 4294901760
  %170 = vmatprep.subr.mxu0 %v169
  %v171 = vand.u32 %v131, 4294901760
  %172 = vmatpush1.msra.mxu0 %v171
  %v173 = vand.u32 %v134, 4294901760
  %174 = vmatprep.subr.mxu0 %v173
  %v175 = vand.u32 %v133, 4294901760
  %176 = vmatpush1.msra.mxu0 %v175
  %v177 = vand.u32 %v136, 4294901760
  %178 = vmatprep.subr.mxu0 %v177
  %v179 = vand.u32 %v135, 4294901760
  %180 = vmatpush1.msra.mxu0 %v179
  %v181 = vand.u32 %v138, 4294901760
  %182 = vmatprep.subr.mxu0 %v181
  %v183 = vand.u32 %v137, 4294901760
  %184 = vmatpush1.msra.mxu0 %v183
  %v185 = vand.u32 %v140, 4294901760
  %186 = vmatprep.subr.mxu0 %v185
  %v187 = vand.u32 %v139, 4294901760
  %188 = vmatpush1.msra.mxu0 %v187
  %v189 = vand.u32 %v142, 4294901760
  %190 = vmatprep.subr.mxu0 %v189
  %v191 = vand.u32 %v141, 4294901760
  %192 = vmatpush1.msra.mxu0 %v191
  %v193 = vand.u32 %v144, 4294901760
  %194 = vmatprep.subr.mxu0 %v193
  %v195 = vand.u32 %v143, 4294901760
  %196 = vmatpush1.msra.mxu0 %v195
  %v197 = vand.u32 %v146, 4294901760
  %198 = vmatprep.subr.mxu0 %v197
  %v199 = vand.u32 %v145, 4294901760
  %200 = vmatpush1.msra.mxu0 %v199
  %v201 = vand.u32 %v148, 4294901760
  %202 = vmatprep.subr.mxu0 %v201
  %v203 = vand.u32 %v147, 4294901760
  %204 = vmatpush1.msra.mxu0 %v203
  %v205 = vand.u32 %v150, 4294901760
  %206 = vmatprep.subr.mxu0 %v205
  %v207 = vand.u32 %v149, 4294901760
  %208 = vmatpush1.msra.mxu0 %v207
  %v209 = vand.u32 %v152, 4294901760
  %210 = vmatprep.subr.mxu0 %v209
  %v211 = vand.u32 %v151, 4294901760
  %212 = vmatpush1.msra.mxu0 %v211
  %v213 = vand.u32 %v154, 4294901760
  %214 = vmatprep.subr.mxu0 %v213
  %v215 = vand.u32 %v153, 4294901760
  %216 = vmatpush1.msra.mxu0 %v215
  %v217 = vand.u32 %v156, 4294901760
  %218 = vmatprep.subr.mxu0 %v217
  %v219 = vand.u32 %v155, 4294901760
  %220 = vmatpush1.msra.mxu0 %v219
  %221 = vmatprep.subr.mxu0 0.0
  %222 = vmatpush1.msra.mxu0 0.0
  %223 = vmatprep.subr.mxu0 0.0
  %224 = vmatpush1.msra.mxu0 0.0
  %225 = vmatprep.subr.mxu0 0.0
  %226 = vmatpush1.msra.mxu0 0.0
  %227 = vmatprep.subr.mxu0 0.0
  %228 = vmatpush1.msra.mxu0 0.0
  %229 = vmatprep.subr.mxu0 0.0
  %230 = vmatpush1.msra.mxu0 0.0
  %231 = vmatprep.subr.mxu0 0.0
  %232 = vmatpush1.msra.mxu0 0.0
  %233 = vmatprep.subr.mxu0 0.0
  %234 = vmatpush1.msra.mxu0 0.0
  %235 = vmatprep.subr.mxu0 0.0
  %236 = vmatpush1.msra.mxu0 0.0
  %237 = vmatprep.subr.mxu0 0.0
  %238 = vmatpush1.msra.mxu0 0.0
  %239 = vmatprep.subr.mxu0 0.0
  %240 = vmatpush1.msra.mxu0 0.0
  %241 = vmatprep.subr.mxu0 0.0
  %242 = vmatpush1.msra.mxu0 0.0
  %243 = vmatprep.subr.mxu0 0.0
  %244 = vmatpush1.msra.mxu0 0.0
  %245 = vmatprep.subr.mxu0 0.0
  %246 = vmatpush1.msra.mxu0 0.0
  %247 = vmatprep.subr.mxu0 0.0
  %248 = vmatpush1.msra.mxu0 0.0
  %249 = vmatprep.subr.mxu0 0.0
  %250 = vmatpush1.msra.mxu0 0.0
  %251 = vmatprep.subr.mxu0 0.0
  %252 = vmatpush1.msra.mxu0 0.0
  %253 = vmatprep.mubr.f32.mxu0 0.0
  %v254 = vand.u32 %v109, 4294901760
  %v255 = vsub.f32 %v109, %v254
  %v256 = vand.u32 %v255, 4294901760
  %v257 = vsub.f32 %v255, %v256
  %v258 = vand.u32 %v257, 4294901760
  %259 = vmatmul.mubr.f32.gmra.mrb[0].mxu0 %v258
  %v260 = vpop.f32.mrb[0].mxu0
  %v261 = vadd.f32 0.0, %v260
  %v262 = vpop.f32.mrb[0].mxu0
  %v263 = vadd.f32 0.0, %v262
  %264 = vmatprep.mubr.f32.mxu0 0.0
  %v265 = vand.u32 %v110, 4294901760
  %v266 = vsub.f32 %v110, %v265
  %v267 = vand.u32 %v266, 4294901760
  %v268 = vsub.f32 %v266, %v267
  %v269 = vand.u32 %v268, 4294901760
  %270 = vmatmul.mubr.f32.gmra.mrb[0].mxu0 %v269
  %v271 = vpop.f32.mrb[0].mxu0
  %v272 = vadd.f32 0.0, %v271
  %v273 = vpop.f32.mrb[0].mxu0
  %v274 = vadd.f32 0.0, %v273
  %275 = vmatprep.mubr.f32.mxu0 0.0
  %v276 = vand.u32 %v111, 4294901760
  %v277 = vsub.f32 %v111, %v276
  %v278 = vand.u32 %v277, 4294901760
  %v279 = vsub.f32 %v277, %v278
  %v280 = vand.u32 %v279, 4294901760
  %281 = vmatmul.mubr.f32.gmra.mrb[0].mxu0 %v280
  %v282 = vpop.f32.mrb[0].mxu0
  %v283 = vadd.f32 0.0, %v282
  %v284 = vpop.f32.mrb[0].mxu0
  %v285 = vadd.f32 0.0, %v284
  %286 = vmatprep.mubr.f32.mxu0 0.0
  %v287 = vand.u32 %v112, 4294901760
  %v288 = vsub.f32 %v112, %v287
  %v289 = vand.u32 %v288, 4294901760
  %v290 = vsub.f32 %v288, %v289
  %v291 = vand.u32 %v290, 4294901760
  %292 = vmatmul.mubr.f32.gmra.mrb[0].mxu0 %v291
  %v293 = vpop.f32.mrb[0].mxu0
  %v294 = vadd.f32 0.0, %v293
  %v295 = vpop.f32.mrb[0].mxu0
  %v296 = vadd.f32 0.0, %v295
  %297 = vmatprep.mubr.f32.mxu0 0.0
  %v298 = vand.u32 %v113, 4294901760
  %v299 = vsub.f32 %v113, %v298
  %v300 = vand.u32 %v299, 4294901760
  %v301 = vsub.f32 %v299, %v300
  %v302 = vand.u32 %v301, 4294901760
  %303 = vmatmul.mubr.f32.gmra.mrb[0].mxu0 %v302
  %v304 = vpop.f32.mrb[0].mxu0
  %v305 = vadd.f32 0.0, %v304
  %v306 = vpop.f32.mrb[0].mxu0
  %v307 = vadd.f32 0.0, %v306
  %308 = vmatprep.mubr.f32.mxu0 0.0
  %v309 = vand.u32 %v114, 4294901760
  %v310 = vsub.f32 %v114, %v309
  %v311 = vand.u32 %v310, 4294901760
  %v312 = vsub.f32 %v310, %v311
  %v313 = vand.u32 %v312, 4294901760
  %314 = vmatmul.mubr.f32.gmra.mrb[0].mxu0 %v313
  %v315 = vpop.f32.mrb[0].mxu0
  %v316 = vadd.f32 0.0, %v315
  %v317 = vpop.f32.mrb[0].mxu0
  %v318 = vadd.f32 0.0, %v317
  %319 = vmatprep.mubr.f32.mxu0 0.0
  %v320 = vand.u32 %v115, 4294901760
  %v321 = vsub.f32 %v115, %v320
  %v322 = vand.u32 %v321, 4294901760
  %v323 = vsub.f32 %v321, %v322
  %v324 = vand.u32 %v323, 4294901760
  %325 = vmatmul.mubr.f32.gmra.mrb[0].mxu0 %v324
  %v326 = vpop.f32.mrb[0].mxu0
  %v327 = vadd.f32 0.0, %v326
  %v328 = vpop.f32.mrb[0].mxu0
  %v329 = vadd.f32 0.0, %v328
  %330 = vmatprep.mubr.f32.mxu0 0.0
  %v331 = vand.u32 %v116, 4294901760
  %v332 = vsub.f32 %v116, %v331
  %v333 = vand.u32 %v332, 4294901760
  %v334 = vsub.f32 %v332, %v333
  %v335 = vand.u32 %v334, 4294901760
  %336 = vmatmul.mubr.f32.gmra.mrb[0].mxu0 %v335
  %v337 = vpop.f32.mrb[0].mxu0
  %v338 = vadd.f32 0.0, %v337
  %v339 = vpop.f32.mrb[0].mxu0
  %v340 = vadd.f32 0.0, %v339
  %341 = vmatprep.mubr.f32.mxu0 0.0
  %v342 = vand.u32 %v117, 4294901760
  %v343 = vsub.f32 %v117, %v342
  %v344 = vand.u32 %v343, 4294901760
  %v345 = vsub.f32 %v343, %v344
  %v346 = vand.u32 %v345, 4294901760
  %347 = vmatmul.mubr.f32.gmra.mrb[0].mxu0 %v346
  %v348 = vpop.f32.mrb[0].mxu0
  %v349 = vadd.f32 0.0, %v348
  %v350 = vpop.f32.mrb[0].mxu0
  %v351 = vadd.f32 0.0, %v350
  %352 = vmatprep.mubr.f32.mxu0 0.0
  %v353 = vand.u32 %v118, 4294901760
  %v354 = vsub.f32 %v118, %v353
  %v355 = vand.u32 %v354, 4294901760
  %v356 = vsub.f32 %v354, %v355
  %v357 = vand.u32 %v356, 4294901760
  %358 = vmatmul.mubr.f32.gmra.mrb[0].mxu0 %v357
  %v359 = vpop.f32.mrb[0].mxu0
  %v360 = vadd.f32 0.0, %v359
  %v361 = vpop.f32.mrb[0].mxu0
  %v362 = vadd.f32 0.0, %v361
  %363 = vmatprep.mubr.f32.mxu0 0.0
  %v364 = vand.u32 %v119, 4294901760
  %v365 = vsub.f32 %v119, %v364
  %v366 = vand.u32 %v365, 4294901760
  %v367 = vsub.f32 %v365, %v366
  %v368 = vand.u32 %v367, 4294901760
  %369 = vmatmul.mubr.f32.gmra.mrb[0].mxu0 %v368
  %v370 = vpop.f32.mrb[0].mxu0
  %v371 = vadd.f32 0.0, %v370
  %v372 = vpop.f32.mrb[0].mxu0
  %v373 = vadd.f32 0.0, %v372
  %374 = vmatprep.mubr.f32.mxu0 0.0
  %v375 = vand.u32 %v120, 4294901760
  %v376 = vsub.f32 %v120, %v375
  %v377 = vand.u32 %v376, 4294901760
  %v378 = vsub.f32 %v376, %v377
  %v379 = vand.u32 %v378, 4294901760
  %380 = vmatmul.mubr.f32.gmra.mrb[0].mxu0 %v379
  %v381 = vpop.f32.mrb[0].mxu0
  %v382 = vadd.f32 0.0, %v381
  %v383 = vpop.f32.mrb[0].mxu0
  %v384 = vadd.f32 0.0, %v383
  %385 = vmatprep.mubr.f32.mxu0 0.0
  %v386 = vand.u32 %v121, 4294901760
  %v387 = vsub.f32 %v121, %v386
  %v388 = vand.u32 %v387, 4294901760
  %v389 = vsub.f32 %v387, %v388
  %v390 = vand.u32 %v389, 4294901760
  %391 = vmatmul.mubr.f32.gmra.mrb[0].mxu0 %v390
  %v392 = vpop.f32.mrb[0].mxu0
  %v393 = vadd.f32 0.0, %v392
  %v394 = vpop.f32.mrb[0].mxu0
  %v395 = vadd.f32 0.0, %v394
  %396 = vmatprep.mubr.f32.mxu0 0.0
  %v397 = vand.u32 %v122, 4294901760
  %v398 = vsub.f32 %v122, %v397
  %v399 = vand.u32 %v398, 4294901760
  %v400 = vsub.f32 %v398, %v399
  %v401 = vand.u32 %v400, 4294901760
  %402 = vmatmul.mubr.f32.gmra.mrb[0].mxu0 %v401
  %v403 = vpop.f32.mrb[0].mxu0
  %v404 = vadd.f32 0.0, %v403
  %v405 = vpop.f32.mrb[0].mxu0
  %v406 = vadd.f32 0.0, %v405
  %407 = vmatprep.mubr.f32.mxu0 0.0
  %v408 = vand.u32 %v123, 4294901760
  %v409 = vsub.f32 %v123, %v408
  %v410 = vand.u32 %v409, 4294901760
  %v411 = vsub.f32 %v409, %v410
  %v412 = vand.u32 %v411, 4294901760
  %413 = vmatmul.mubr.f32.gmra.mrb[0].mxu0 %v412
  %v414 = vpop.f32.mrb[0].mxu0
  %v415 = vadd.f32 0.0, %v414
  %v416 = vpop.f32.mrb[0].mxu0
  %v417 = vadd.f32 0.0, %v416
  %418 = vmatprep.mubr.f32.mxu0 0.0
  %v419 = vand.u32 %v124, 4294901760
  %v420 = vsub.f32 %v124, %v419
  %v421 = vand.u32 %v420, 4294901760
  %v422 = vsub.f32 %v420, %v421
  %v423 = vand.u32 %v422, 4294901760
  %424 = vmatmul.mubr.f32.gmra.mrb[0].mxu0 %v423
  %v425 = vpop.f32.mrb[0].mxu0
  %v426 = vadd.f32 0.0, %v425
  %v427 = vpop.f32.mrb[0].mxu0
  %v428 = vadd.f32 0.0, %v427
  %429 = vdwg.mxu0
  %v430 = vand.u32 %v126, 4294901760
  %v431 = vsub.f32 %v126, %v430
  %v432 = vand.u32 %v431, 4294901760
  %v433 = vsub.f32 %v431, %v432
  %v434 = vand.u32 %v433, 4294901760
  %435 = vmatprep.subr.mxu0 %v434
  %v436 = vand.u32 %v125, 4294901760
  %v437 = vsub.f32 %v125, %v436
  %v438 = vand.u32 %v437, 4294901760
  %v439 = vsub.f32 %v437, %v438
  %v440 = vand.u32 %v439, 4294901760
  %441 = vmatpush1.msra.mxu0 %v440
  %v442 = vand.u32 %v128, 4294901760
  %v443 = vsub.f32 %v128, %v442
  %v444 = vand.u32 %v443, 4294901760
  %v445 = vsub.f32 %v443, %v444
  %v446 = vand.u32 %v445, 4294901760
  %447 = vmatprep.subr.mxu0 %v446
  %v448 = vand.u32 %v127, 4294901760
  %v449 = vsub.f32 %v127, %v448
  %v450 = vand.u32 %v449, 4294901760
  %v451 = vsub.f32 %v449, %v450
  %v452 = vand.u32 %v451, 4294901760
  %453 = vmatpush1.msra.mxu0 %v452
  %v454 = vand.u32 %v130, 4294901760
  %v455 = vsub.f32 %v130, %v454
  %v456 = vand.u32 %v455, 4294901760
  %v457 = vsub.f32 %v455, %v456
  %v458 = vand.u32 %v457, 4294901760
  %459 = vmatprep.subr.mxu0 %v458
  %v460 = vand.u32 %v129, 4294901760
  %v461 = vsub.f32 %v129, %v460
  %v462 = vand.u32 %v461, 4294901760
  %v463 = vsub.f32 %v461, %v462
  %v464 = vand.u32 %v463, 4294901760
  %465 = vmatpush1.msra.mxu0 %v464
  %v466 = vand.u32 %v132, 4294901760
  %v467 = vsub.f32 %v132, %v466
  %v468 = vand.u32 %v467, 4294901760
  %v469 = vsub.f32 %v467, %v468
  %v470 = vand.u32 %v469, 4294901760
  %471 = vmatprep.subr.mxu0 %v470
  %v472 = vand.u32 %v131, 4294901760
  %v473 = vsub.f32 %v131, %v472
  %v474 = vand.u32 %v473, 4294901760
  %v475 = vsub.f32 %v473, %v474
  %v476 = vand.u32 %v475, 4294901760
  %477 = vmatpush1.msra.mxu0 %v476
  %v478 = vand.u32 %v134, 4294901760
  %v479 = vsub.f32 %v134, %v478
  %v480 = vand.u32 %v479, 4294901760
  %v481 = vsub.f32 %v479, %v480
  %v482 = vand.u32 %v481, 4294901760
  %483 = vmatprep.subr.mxu0 %v482
  %v484 = vand.u32 %v133, 4294901760
  %v485 = vsub.f32 %v133, %v484
  %v486 = vand.u32 %v485, 4294901760
  %v487 = vsub.f32 %v485, %v486
  %v488 = vand.u32 %v487, 4294901760
  %489 = vmatpush1.msra.mxu0 %v488
  %v490 = vand.u32 %v136, 4294901760
  %v491 = vsub.f32 %v136, %v490
  %v492 = vand.u32 %v491, 4294901760
  %v493 = vsub.f32 %v491, %v492
  %v494 = vand.u32 %v493, 4294901760
  %495 = vmatprep.subr.mxu0 %v494
  %v496 = vand.u32 %v135, 4294901760
  %v497 = vsub.f32 %v135, %v496
  %v498 = vand.u32 %v497, 4294901760
  %v499 = vsub.f32 %v497, %v498
  %v500 = vand.u32 %v499, 4294901760
  %501 = vmatpush1.msra.mxu0 %v500
  %v502 = vand.u32 %v138, 4294901760
  %v503 = vsub.f32 %v138, %v502
  %v504 = vand.u32 %v503, 4294901760
  %v505 = vsub.f32 %v503, %v504
  %v506 = vand.u32 %v505, 4294901760
  %507 = vmatprep.subr.mxu0 %v506
  %v508 = vand.u32 %v137, 4294901760
  %v509 = vsub.f32 %v137, %v508
  %v510 = vand.u32 %v509, 4294901760
  %v511 = vsub.f32 %v509, %v510
  %v512 = vand.u32 %v511, 4294901760
  %513 = vmatpush1.msra.mxu0 %v512
  %v514 = vand.u32 %v140, 4294901760
  %v515 = vsub.f32 %v140, %v514
  %v516 = vand.u32 %v515, 4294901760
  %v517 = vsub.f32 %v515, %v516
  %v518 = vand.u32 %v517, 4294901760
  %519 = vmatprep.subr.mxu0 %v518
  %v520 = vand.u32 %v139, 4294901760
  %v521 = vsub.f32 %v139, %v520
  %v522 = vand.u32 %v521, 4294901760
  %v523 = vsub.f32 %v521, %v522
  %v524 = vand.u32 %v523, 4294901760
  %525 = vmatpush1.msra.mxu0 %v524
  %v526 = vand.u32 %v142, 4294901760
  %v527 = vsub.f32 %v142, %v526
  %v528 = vand.u32 %v527, 4294901760
  %v529 = vsub.f32 %v527, %v528
  %v530 = vand.u32 %v529, 4294901760
  %531 = vmatprep.subr.mxu0 %v530
  %v532 = vand.u32 %v141, 4294901760
  %v533 = vsub.f32 %v141, %v532
  %v534 = vand.u32 %v533, 4294901760
  %v535 = vsub.f32 %v533, %v534
  %v536 = vand.u32 %v535, 4294901760
  %537 = vmatpush1.msra.mxu0 %v536
  %v538 = vand.u32 %v144, 4294901760
  %v539 = vsub.f32 %v144, %v538
  %v540 = vand.u32 %v539, 4294901760
  %v541 = vsub.f32 %v539, %v540
  %v542 = vand.u32 %v541, 4294901760
  %543 = vmatprep.subr.mxu0 %v542
  %v544 = vand.u32 %v143, 4294901760
  %v545 = vsub.f32 %v143, %v544
  %v546 = vand.u32 %v545, 4294901760
  %v547 = vsub.f32 %v545, %v546
  %v548 = vand.u32 %v547, 4294901760
  %549 = vmatpush1.msra.mxu0 %v548
  %v550 = vand.u32 %v146, 4294901760
  %v551 = vsub.f32 %v146, %v550
  %v552 = vand.u32 %v551, 4294901760
  %v553 = vsub.f32 %v551, %v552
  %v554 = vand.u32 %v553, 4294901760
  %555 = vmatprep.subr.mxu0 %v554
  %v556 = vand.u32 %v145, 4294901760
  %v557 = vsub.f32 %v145, %v556
  %v558 = vand.u32 %v557, 4294901760
  %v559 = vsub.f32 %v557, %v558
  %v560 = vand.u32 %v559, 4294901760
  %561 = vmatpush1.msra.mxu0 %v560
  %v562 = vand.u32 %v148, 4294901760
  %v563 = vsub.f32 %v148, %v562
  %v564 = vand.u32 %v563, 4294901760
  %v565 = vsub.f32 %v563, %v564
  %v566 = vand.u32 %v565, 4294901760
  %567 = vmatprep.subr.mxu0 %v566
  %v568 = vand.u32 %v147, 4294901760
  %v569 = vsub.f32 %v147, %v568
  %v570 = vand.u32 %v569, 4294901760
  %v571 = vsub.f32 %v569, %v570
  %v572 = vand.u32 %v571, 4294901760
  %573 = vmatpush1.msra.mxu0 %v572
  %v574 = vand.u32 %v150, 4294901760
  %v575 = vsub.f32 %v150, %v574
  %v576 = vand.u32 %v575, 4294901760
  %v577 = vsub.f32 %v575, %v576
  %v578 = vand.u32 %v577, 4294901760
  %579 = vmatprep.subr.mxu0 %v578
  %v580 = vand.u32 %v149, 4294901760
  %v581 = vsub.f32 %v149, %v580
  %v582 = vand.u32 %v581, 4294901760
  %v583 = vsub.f32 %v581, %v582
  %v584 = vand.u32 %v583, 4294901760
  %585 = vmatpush1.msra.mxu0 %v584
  %v586 = vand.u32 %v152, 4294901760
  %v587 = vsub.f32 %v152, %v586
  %v588 = vand.u32 %v587, 4294901760
  %v589 = vsub.f32 %v587, %v588
  %v590 = vand.u32 %v589, 4294901760
  %591 = vmatprep.subr.mxu0 %v590
  %v592 = vand.u32 %v151, 4294901760
  %v593 = vsub.f32 %v151, %v592
  %v594 = vand.u32 %v593, 4294901760
  %v595 = vsub.f32 %v593, %v594
  %v596 = vand.u32 %v595, 4294901760
  %597 = vmatpush1.msra.mxu0 %v596
  %v598 = vand.u32 %v154, 4294901760
  %v599 = vsub.f32 %v154, %v598
  %v600 = vand.u32 %v599, 4294901760
  %v601 = vsub.f32 %v599, %v600
  %v602 = vand.u32 %v601, 4294901760
  %603 = vmatprep.subr.mxu0 %v602
  %v604 = vand.u32 %v153, 4294901760
  %v605 = vsub.f32 %v153, %v604
  %v606 = vand.u32 %v605, 4294901760
  %v607 = vsub.f32 %v605, %v606
  %v608 = vand.u32 %v607, 4294901760
  %609 = vmatpush1.msra.mxu0 %v608
  %v610 = vand.u32 %v156, 4294901760
  %v611 = vsub.f32 %v156, %v610
  %v612 = vand.u32 %v611, 4294901760
  %v613 = vsub.f32 %v611, %v612
  %v614 = vand.u32 %v613, 4294901760
  %615 = vmatprep.subr.mxu0 %v614
  %v616 = vand.u32 %v155, 4294901760
  %v617 = vsub.f32 %v155, %v616
  %v618 = vand.u32 %v617, 4294901760
  %v619 = vsub.f32 %v617, %v618
  %v620 = vand.u32 %v619, 4294901760
  %621 = vmatpush1.msra.mxu0 %v620
  %622 = vmatprep.subr.mxu0 0.0
  %623 = vmatpush1.msra.mxu0 0.0
  %624 = vmatprep.subr.mxu0 0.0
  %625 = vmatpush1.msra.mxu0 0.0
  %626 = vmatprep.subr.mxu0 0.0
  %627 = vmatpush1.msra.mxu0 0.0
  %628 = vmatprep.subr.mxu0 0.0
  %629 = vmatpush1.msra.mxu0 0.0
  %630 = vmatprep.subr.mxu0 0.0
  %631 = vmatpush1.msra.mxu0 0.0
  %632 = vmatprep.subr.mxu0 0.0
  %633 = vmatpush1.msra.mxu0 0.0
  %634 = vmatprep.subr.mxu0 0.0
  %635 = vmatpush1.msra.mxu0 0.0
  %636 = vmatprep.subr.mxu0 0.0
  %637 = vmatpush1.msra.mxu0 0.0
  %638 = vmatprep.subr.mxu0 0.0
  %639 = vmatpush1.msra.mxu0 0.0
  %640 = vmatprep.subr.mxu0 0.0
  %641 = vmatpush1.msra.mxu0 0.0
  %642 = vmatprep.subr.mxu0 0.0
  %643 = vmatpush1.msra.mxu0 0.0
  %644 = vmatprep.subr.mxu0 0.0
  %645 = vmatpush1.msra.mxu0 0.0
  %646 = vmatprep.subr.mxu0 0.0
  %647 = vmatpush1.msra.mxu0 0.0
  %648 = vmatprep.subr.mxu0 0.0
  %649 = vmatpush1.msra.mxu0 0.0
  %650 = vmatprep.subr.mxu0 0.0
  %651 = vmatpush1.msra.mxu0 0.0
  %652 = vmatprep.subr.mxu0 0.0
  %653 = vmatpush1.msra.mxu0 0.0
  %654 = vmatprep.mubr.f32.mxu0 0.0
  %v655 = vand.u32 %v109, 4294901760
  %656 = vmatmul.mubr.f32.gmra.mrb[0].mxu0 %v655
  %v657 = vpop.f32.mrb[0].mxu0
  %v658 = vadd.f32 %v261, %v657
  %v659 = vpop.f32.mrb[0].mxu0
  %v660 = vadd.f32 %v263, %v659
  %661 = vmatprep.mubr.f32.mxu0 0.0
  %v662 = vand.u32 %v110, 4294901760
  %663 = vmatmul.mubr.f32.gmra.mrb[0].mxu0 %v662
  %v664 = vpop.f32.mrb[0].mxu0
  %v665 = vadd.f32 %v272, %v664
  %v666 = vpop.f32.mrb[0].mxu0
  %v667 = vadd.f32 %v274, %v666
  %668 = vmatprep.mubr.f32.mxu0 0.0
  %v669 = vand.u32 %v111, 4294901760
  %670 = vmatmul.mubr.f32.gmra.mrb[0].mxu0 %v669
  %v671 = vpop.f32.mrb[0].mxu0
  %v672 = vadd.f32 %v283, %v671
  %v673 = vpop.f32.mrb[0].mxu0
  %v674 = vadd.f32 %v285, %v673
  %675 = vmatprep.mubr.f32.mxu0 0.0
  %v676 = vand.u32 %v112, 4294901760
  %677 = vmatmul.mubr.f32.gmra.mrb[0].mxu0 %v676
  %v678 = vpop.f32.mrb[0].mxu0
  %v679 = vadd.f32 %v294, %v678
  %v680 = vpop.f32.mrb[0].mxu0
  %v681 = vadd.f32 %v296, %v680
  %682 = vmatprep.mubr.f32.mxu0 0.0
  %v683 = vand.u32 %v113, 4294901760
  %684 = vmatmul.mubr.f32.gmra.mrb[0].mxu0 %v683
  %v685 = vpop.f32.mrb[0].mxu0
  %v686 = vadd.f32 %v305, %v685
  %v687 = vpop.f32.mrb[0].mxu0
  %v688 = vadd.f32 %v307, %v687
  %689 = vmatprep.mubr.f32.mxu0 0.0
  %v690 = vand.u32 %v114, 4294901760
  %691 = vmatmul.mubr.f32.gmra.mrb[0].mxu0 %v690
  %v692 = vpop.f32.mrb[0].mxu0
  %v693 = vadd.f32 %v316, %v692
  %v694 = vpop.f32.mrb[0].mxu0
  %v695 = vadd.f32 %v318, %v694
  %696 = vmatprep.mubr.f32.mxu0 0.0
  %v697 = vand.u32 %v115, 4294901760
  %698 = vmatmul.mubr.f32.gmra.mrb[0].mxu0 %v697
  %v699 = vpop.f32.mrb[0].mxu0
  %v700 = vadd.f32 %v327, %v699
  %v701 = vpop.f32.mrb[0].mxu0
  %v702 = vadd.f32 %v329, %v701
  %703 = vmatprep.mubr.f32.mxu0 0.0
  %v704 = vand.u32 %v116, 4294901760
  %705 = vmatmul.mubr.f32.gmra.mrb[0].mxu0 %v704
  %v706 = vpop.f32.mrb[0].mxu0
  %v707 = vadd.f32 %v338, %v706
  %v708 = vpop.f32.mrb[0].mxu0
  %v709 = vadd.f32 %v340, %v708
  %710 = vmatprep.mubr.f32.mxu0 0.0
  %v711 = vand.u32 %v117, 4294901760
  %712 = vmatmul.mubr.f32.gmra.mrb[0].mxu0 %v711
  %v713 = vpop.f32.mrb[0].mxu0
  %v714 = vadd.f32 %v349, %v713
  %v715 = vpop.f32.mrb[0].mxu0
  %v716 = vadd.f32 %v351, %v715
  %717 = vmatprep.mubr.f32.mxu0 0.0
  %v718 = vand.u32 %v118, 4294901760
  %719 = vmatmul.mubr.f32.gmra.mrb[0].mxu0 %v718
  %v720 = vpop.f32.mrb[0].mxu0
  %v721 = vadd.f32 %v360, %v720
  %v722 = vpop.f32.mrb[0].mxu0
  %v723 = vadd.f32 %v362, %v722
  %724 = vmatprep.mubr.f32.mxu0 0.0
  %v725 = vand.u32 %v119, 4294901760
  %726 = vmatmul.mubr.f32.gmra.mrb[0].mxu0 %v725
  %v727 = vpop.f32.mrb[0].mxu0
  %v728 = vadd.f32 %v371, %v727
  %v729 = vpop.f32.mrb[0].mxu0
  %v730 = vadd.f32 %v373, %v729
  %731 = vmatprep.mubr.f32.mxu0 0.0
  %v732 = vand.u32 %v120, 4294901760
  %733 = vmatmul.mubr.f32.gmra.mrb[0].mxu0 %v732
  %v734 = vpop.f32.mrb[0].mxu0
  %v735 = vadd.f32 %v382, %v734
  %v736 = vpop.f32.mrb[0].mxu0
  %v737 = vadd.f32 %v384, %v736
  %738 = vmatprep.mubr.f32.mxu0 0.0
  %v739 = vand.u32 %v121, 4294901760
  %740 = vmatmul.mubr.f32.gmra.mrb[0].mxu0 %v739
  %v741 = vpop.f32.mrb[0].mxu0
  %v742 = vadd.f32 %v393, %v741
  %v743 = vpop.f32.mrb[0].mxu0
  %v744 = vadd.f32 %v395, %v743
  %745 = vmatprep.mubr.f32.mxu0 0.0
  %v746 = vand.u32 %v122, 4294901760
  %747 = vmatmul.mubr.f32.gmra.mrb[0].mxu0 %v746
  %v748 = vpop.f32.mrb[0].mxu0
  %v749 = vadd.f32 %v404, %v748
  %v750 = vpop.f32.mrb[0].mxu0
  %v751 = vadd.f32 %v406, %v750
  %752 = vmatprep.mubr.f32.mxu0 0.0
  %v753 = vand.u32 %v123, 4294901760
  %754 = vmatmul.mubr.f32.gmra.mrb[0].mxu0 %v753
  %v755 = vpop.f32.mrb[0].mxu0
  %v756 = vadd.f32 %v415, %v755
  %v757 = vpop.f32.mrb[0].mxu0
  %v758 = vadd.f32 %v417, %v757
  %759 = vmatprep.mubr.f32.mxu0 0.0
  %v760 = vand.u32 %v124, 4294901760
  %761 = vmatmul.mubr.f32.gmra.mrb[0].mxu0 %v760
  %v762 = vpop.f32.mrb[0].mxu0
  %v763 = vadd.f32 %v426, %v762
  %v764 = vpop.f32.mrb[0].mxu0
  %v765 = vadd.f32 %v428, %v764
  %766 = vdwg.mxu0
  %v767 = vand.u32 %v126, 4294901760
  %v768 = vsub.f32 %v126, %v767
  %769 = vmatprep.subr.mxu0 %v768
  %v770 = vand.u32 %v125, 4294901760
  %v771 = vsub.f32 %v125, %v770
  %772 = vmatpush1.msra.mxu0 %v771
  %v773 = vand.u32 %v128, 4294901760
  %v774 = vsub.f32 %v128, %v773
  %775 = vmatprep.subr.mxu0 %v774
  %v776 = vand.u32 %v127, 4294901760
  %v777 = vsub.f32 %v127, %v776
  %778 = vmatpush1.msra.mxu0 %v777
  %v779 = vand.u32 %v130, 4294901760
  %v780 = vsub.f32 %v130, %v779
  %781 = vmatprep.subr.mxu0 %v780
  %v782 = vand.u32 %v129, 4294901760
  %v783 = vsub.f32 %v129, %v782
  %784 = vmatpush1.msra.mxu0 %v783
  %v785 = vand.u32 %v132, 4294901760
  %v786 = vsub.f32 %v132, %v785
  %787 = vmatprep.subr.mxu0 %v786
  %v788 = vand.u32 %v131, 4294901760
  %v789 = vsub.f32 %v131, %v788
  %790 = vmatpush1.msra.mxu0 %v789
  %v791 = vand.u32 %v134, 4294901760
  %v792 = vsub.f32 %v134, %v791
  %793 = vmatprep.subr.mxu0 %v792
  %v794 = vand.u32 %v133, 4294901760
  %v795 = vsub.f32 %v133, %v794
  %796 = vmatpush1.msra.mxu0 %v795
  %v797 = vand.u32 %v136, 4294901760
  %v798 = vsub.f32 %v136, %v797
  %799 = vmatprep.subr.mxu0 %v798
  %v800 = vand.u32 %v135, 4294901760
  %v801 = vsub.f32 %v135, %v800
  %802 = vmatpush1.msra.mxu0 %v801
  %v803 = vand.u32 %v138, 4294901760
  %v804 = vsub.f32 %v138, %v803
  %805 = vmatprep.subr.mxu0 %v804
  %v806 = vand.u32 %v137, 4294901760
  %v807 = vsub.f32 %v137, %v806
  %808 = vmatpush1.msra.mxu0 %v807
  %v809 = vand.u32 %v140, 4294901760
  %v810 = vsub.f32 %v140, %v809
  %811 = vmatprep.subr.mxu0 %v810
  %v812 = vand.u32 %v139, 4294901760
  %v813 = vsub.f32 %v139, %v812
  %814 = vmatpush1.msra.mxu0 %v813
  %v815 = vand.u32 %v142, 4294901760
  %v816 = vsub.f32 %v142, %v815
  %817 = vmatprep.subr.mxu0 %v816
  %v818 = vand.u32 %v141, 4294901760
  %v819 = vsub.f32 %v141, %v818
  %820 = vmatpush1.msra.mxu0 %v819
  %v821 = vand.u32 %v144, 4294901760
  %v822 = vsub.f32 %v144, %v821
  %823 = vmatprep.subr.mxu0 %v822
  %v824 = vand.u32 %v143, 4294901760
  %v825 = vsub.f32 %v143, %v824
  %826 = vmatpush1.msra.mxu0 %v825
  %v827 = vand.u32 %v146, 4294901760
  %v828 = vsub.f32 %v146, %v827
  %829 = vmatprep.subr.mxu0 %v828
  %v830 = vand.u32 %v145, 4294901760
  %v831 = vsub.f32 %v145, %v830
  %832 = vmatpush1.msra.mxu0 %v831
  %v833 = vand.u32 %v148, 4294901760
  %v834 = vsub.f32 %v148, %v833
  %835 = vmatprep.subr.mxu0 %v834
  %v836 = vand.u32 %v147, 4294901760
  %v837 = vsub.f32 %v147, %v836
  %838 = vmatpush1.msra.mxu0 %v837
  %v839 = vand.u32 %v150, 4294901760
  %v840 = vsub.f32 %v150, %v839
  %841 = vmatprep.subr.mxu0 %v840
  %v842 = vand.u32 %v149, 4294901760
  %v843 = vsub.f32 %v149, %v842
  %844 = vmatpush1.msra.mxu0 %v843
  %v845 = vand.u32 %v152, 4294901760
  %v846 = vsub.f32 %v152, %v845
  %847 = vmatprep.subr.mxu0 %v846
  %v848 = vand.u32 %v151, 4294901760
  %v849 = vsub.f32 %v151, %v848
  %850 = vmatpush1.msra.mxu0 %v849
  %v851 = vand.u32 %v154, 4294901760
  %v852 = vsub.f32 %v154, %v851
  %853 = vmatprep.subr.mxu0 %v852
  %v854 = vand.u32 %v153, 4294901760
  %v855 = vsub.f32 %v153, %v854
  %856 = vmatpush1.msra.mxu0 %v855
  %v857 = vand.u32 %v156, 4294901760
  %v858 = vsub.f32 %v156, %v857
  %859 = vmatprep.subr.mxu0 %v858
  %v860 = vand.u32 %v155, 4294901760
  %v861 = vsub.f32 %v155, %v860
  %862 = vmatpush1.msra.mxu0 %v861
  %863 = vmatprep.subr.mxu0 0.0
  %864 = vmatpush1.msra.mxu0 0.0
  %865 = vmatprep.subr.mxu0 0.0
  %866 = vmatpush1.msra.mxu0 0.0
  %867 = vmatprep.subr.mxu0 0.0
  %868 = vmatpush1.msra.mxu0 0.0
  %869 = vmatprep.subr.mxu0 0.0
  %870 = vmatpush1.msra.mxu0 0.0
  %871 = vmatprep.subr.mxu0 0.0
  %872 = vmatpush1.msra.mxu0 0.0
  %873 = vmatprep.subr.mxu0 0.0
  %874 = vmatpush1.msra.mxu0 0.0
  %875 = vmatprep.subr.mxu0 0.0
  %876 = vmatpush1.msra.mxu0 0.0
  %877 = vmatprep.subr.mxu0 0.0
  %878 = vmatpush1.msra.mxu0 0.0
  %879 = vmatprep.subr.mxu0 0.0
  %880 = vmatpush1.msra.mxu0 0.0
  %881 = vmatprep.subr.mxu0 0.0
  %882 = vmatpush1.msra.mxu0 0.0
  %883 = vmatprep.subr.mxu0 0.0
  %884 = vmatpush1.msra.mxu0 0.0
  %885 = vmatprep.subr.mxu0 0.0
  %886 = vmatpush1.msra.mxu0 0.0
  %887 = vmatprep.subr.mxu0 0.0
  %888 = vmatpush1.msra.mxu0 0.0
  %889 = vmatprep.subr.mxu0 0.0
  %890 = vmatpush1.msra.mxu0 0.0
  %891 = vmatprep.subr.mxu0 0.0
  %892 = vmatpush1.msra.mxu0 0.0
  %893 = vmatprep.subr.mxu0 0.0
  %894 = vmatpush1.msra.mxu0 0.0
  %895 = vmatprep.mubr.f32.mxu0 0.0
  %v896 = vand.u32 %v109, 4294901760
  %v897 = vsub.f32 %v109, %v896
  %898 = vmatmul.mubr.f32.gmra.mrb[0].mxu0 %v897
  %v899 = vpop.f32.mrb[0].mxu0
  %v900 = vadd.f32 %v658, %v899
  %v901 = vpop.f32.mrb[0].mxu0
  %v902 = vadd.f32 %v660, %v901
  %903 = vmatprep.mubr.f32.mxu0 0.0
  %v904 = vand.u32 %v110, 4294901760
  %v905 = vsub.f32 %v110, %v904
  %906 = vmatmul.mubr.f32.gmra.mrb[0].mxu0 %v905
  %v907 = vpop.f32.mrb[0].mxu0
  %v908 = vadd.f32 %v665, %v907
  %v909 = vpop.f32.mrb[0].mxu0
  %v910 = vadd.f32 %v667, %v909
  %911 = vmatprep.mubr.f32.mxu0 0.0
  %v912 = vand.u32 %v111, 4294901760
  %v913 = vsub.f32 %v111, %v912
  %914 = vmatmul.mubr.f32.gmra.mrb[0].mxu0 %v913
  %v915 = vpop.f32.mrb[0].mxu0
  %v916 = vadd.f32 %v672, %v915
  %v917 = vpop.f32.mrb[0].mxu0
  %v918 = vadd.f32 %v674, %v917
  %919 = vmatprep.mubr.f32.mxu0 0.0
  %v920 = vand.u32 %v112, 4294901760
  %v921 = vsub.f32 %v112, %v920
  %922 = vmatmul.mubr.f32.gmra.mrb[0].mxu0 %v921
  %v923 = vpop.f32.mrb[0].mxu0
  %v924 = vadd.f32 %v679, %v923
  %v925 = vpop.f32.mrb[0].mxu0
  %v926 = vadd.f32 %v681, %v925
  %927 = vmatprep.mubr.f32.mxu0 0.0
  %v928 = vand.u32 %v113, 4294901760
  %v929 = vsub.f32 %v113, %v928
  %930 = vmatmul.mubr.f32.gmra.mrb[0].mxu0 %v929
  %v931 = vpop.f32.mrb[0].mxu0
  %v932 = vadd.f32 %v686, %v931
  %v933 = vpop.f32.mrb[0].mxu0
  %v934 = vadd.f32 %v688, %v933
  %935 = vmatprep.mubr.f32.mxu0 0.0
  %v936 = vand.u32 %v114, 4294901760
  %v937 = vsub.f32 %v114, %v936
  %938 = vmatmul.mubr.f32.gmra.mrb[0].mxu0 %v937
  %v939 = vpop.f32.mrb[0].mxu0
  %v940 = vadd.f32 %v693, %v939
  %v941 = vpop.f32.mrb[0].mxu0
  %v942 = vadd.f32 %v695, %v941
  %943 = vmatprep.mubr.f32.mxu0 0.0
  %v944 = vand.u32 %v115, 4294901760
  %v945 = vsub.f32 %v115, %v944
  %946 = vmatmul.mubr.f32.gmra.mrb[0].mxu0 %v945
  %v947 = vpop.f32.mrb[0].mxu0
  %v948 = vadd.f32 %v700, %v947
  %v949 = vpop.f32.mrb[0].mxu0
  %v950 = vadd.f32 %v702, %v949
  %951 = vmatprep.mubr.f32.mxu0 0.0
  %v952 = vand.u32 %v116, 4294901760
  %v953 = vsub.f32 %v116, %v952
  %954 = vmatmul.mubr.f32.gmra.mrb[0].mxu0 %v953
  %v955 = vpop.f32.mrb[0].mxu0
  %v956 = vadd.f32 %v707, %v955
  %v957 = vpop.f32.mrb[0].mxu0
  %v958 = vadd.f32 %v709, %v957
  %959 = vmatprep.mubr.f32.mxu0 0.0
  %v960 = vand.u32 %v117, 4294901760
  %v961 = vsub.f32 %v117, %v960
  %962 = vmatmul.mubr.f32.gmra.mrb[0].mxu0 %v961
  %v963 = vpop.f32.mrb[0].mxu0
  %v964 = vadd.f32 %v714, %v963
  %v965 = vpop.f32.mrb[0].mxu0
  %v966 = vadd.f32 %v716, %v965
  %967 = vmatprep.mubr.f32.mxu0 0.0
  %v968 = vand.u32 %v118, 4294901760
  %v969 = vsub.f32 %v118, %v968
  %970 = vmatmul.mubr.f32.gmra.mrb[0].mxu0 %v969
  %v971 = vpop.f32.mrb[0].mxu0
  %v972 = vadd.f32 %v721, %v971
  %v973 = vpop.f32.mrb[0].mxu0
  %v974 = vadd.f32 %v723, %v973
  %975 = vmatprep.mubr.f32.mxu0 0.0
  %v976 = vand.u32 %v119, 4294901760
  %v977 = vsub.f32 %v119, %v976
  %978 = vmatmul.mubr.f32.gmra.mrb[0].mxu0 %v977
  %v979 = vpop.f32.mrb[0].mxu0
  %v980 = vadd.f32 %v728, %v979
  %v981 = vpop.f32.mrb[0].mxu0
  %v982 = vadd.f32 %v730, %v981
  %983 = vmatprep.mubr.f32.mxu0 0.0
  %v984 = vand.u32 %v120, 4294901760
  %v985 = vsub.f32 %v120, %v984
  %986 = vmatmul.mubr.f32.gmra.mrb[0].mxu0 %v985
  %v987 = vpop.f32.mrb[0].mxu0
  %v988 = vadd.f32 %v735, %v987
  %v989 = vpop.f32.mrb[0].mxu0
  %v990 = vadd.f32 %v737, %v989
  %991 = vmatprep.mubr.f32.mxu0 0.0
  %v992 = vand.u32 %v121, 4294901760
  %v993 = vsub.f32 %v121, %v992
  %994 = vmatmul.mubr.f32.gmra.mrb[0].mxu0 %v993
  %v995 = vpop.f32.mrb[0].mxu0
  %v996 = vadd.f32 %v742, %v995
  %v997 = vpop.f32.mrb[0].mxu0
  %v998 = vadd.f32 %v744, %v997
  %999 = vmatprep.mubr.f32.mxu0 0.0
  %v1000 = vand.u32 %v122, 4294901760
  %v1001 = vsub.f32 %v122, %v1000
  %1002 = vmatmul.mubr.f32.gmra.mrb[0].mxu0 %v1001
  %v1003 = vpop.f32.mrb[0].mxu0
  %v1004 = vadd.f32 %v749, %v1003
  %v1005 = vpop.f32.mrb[0].mxu0
  %v1006 = vadd.f32 %v751, %v1005
  %1007 = vmatprep.mubr.f32.mxu0 0.0
  %v1008 = vand.u32 %v123, 4294901760
  %v1009 = vsub.f32 %v123, %v1008
  %1010 = vmatmul.mubr.f32.gmra.mrb[0].mxu0 %v1009
  %v1011 = vpop.f32.mrb[0].mxu0
  %v1012 = vadd.f32 %v756, %v1011
  %v1013 = vpop.f32.mrb[0].mxu0
  %v1014 = vadd.f32 %v758, %v1013
  %1015 = vmatprep.mubr.f32.mxu0 0.0
  %v1016 = vand.u32 %v124, 4294901760
  %v1017 = vsub.f32 %v124, %v1016
  %1018 = vmatmul.mubr.f32.gmra.mrb[0].mxu0 %v1017
  %v1019 = vpop.f32.mrb[0].mxu0
  %v1020 = vadd.f32 %v763, %v1019
  %v1021 = vpop.f32.mrb[0].mxu0
  %v1022 = vadd.f32 %v765, %v1021
  %1023 = vdwg.mxu0
  %v1024 = vand.u32 %v126, 4294901760
  %1025 = vmatprep.subr.mxu0 %v1024
  %v1026 = vand.u32 %v125, 4294901760
  %1027 = vmatpush1.msra.mxu0 %v1026
  %v1028 = vand.u32 %v128, 4294901760
  %1029 = vmatprep.subr.mxu0 %v1028
  %v1030 = vand.u32 %v127, 4294901760
  %1031 = vmatpush1.msra.mxu0 %v1030
  %v1032 = vand.u32 %v130, 4294901760
  %1033 = vmatprep.subr.mxu0 %v1032
  %v1034 = vand.u32 %v129, 4294901760
  %1035 = vmatpush1.msra.mxu0 %v1034
  %v1036 = vand.u32 %v132, 4294901760
  %1037 = vmatprep.subr.mxu0 %v1036
  %v1038 = vand.u32 %v131, 4294901760
  %1039 = vmatpush1.msra.mxu0 %v1038
  %v1040 = vand.u32 %v134, 4294901760
  %1041 = vmatprep.subr.mxu0 %v1040
  %v1042 = vand.u32 %v133, 4294901760
  %1043 = vmatpush1.msra.mxu0 %v1042
  %v1044 = vand.u32 %v136, 4294901760
  %1045 = vmatprep.subr.mxu0 %v1044
  %v1046 = vand.u32 %v135, 4294901760
  %1047 = vmatpush1.msra.mxu0 %v1046
  %v1048 = vand.u32 %v138, 4294901760
  %1049 = vmatprep.subr.mxu0 %v1048
  %v1050 = vand.u32 %v137, 4294901760
  %1051 = vmatpush1.msra.mxu0 %v1050
  %v1052 = vand.u32 %v140, 4294901760
  %1053 = vmatprep.subr.mxu0 %v1052
  %v1054 = vand.u32 %v139, 4294901760
  %1055 = vmatpush1.msra.mxu0 %v1054
  %v1056 = vand.u32 %v142, 4294901760
  %1057 = vmatprep.subr.mxu0 %v1056
  %v1058 = vand.u32 %v141, 4294901760
  %1059 = vmatpush1.msra.mxu0 %v1058
  %v1060 = vand.u32 %v144, 4294901760
  %1061 = vmatprep.subr.mxu0 %v1060
  %v1062 = vand.u32 %v143, 4294901760
  %1063 = vmatpush1.msra.mxu0 %v1062
  %v1064 = vand.u32 %v146, 4294901760
  %1065 = vmatprep.subr.mxu0 %v1064
  %v1066 = vand.u32 %v145, 4294901760
  %1067 = vmatpush1.msra.mxu0 %v1066
  %v1068 = vand.u32 %v148, 4294901760
  %1069 = vmatprep.subr.mxu0 %v1068
  %v1070 = vand.u32 %v147, 4294901760
  %1071 = vmatpush1.msra.mxu0 %v1070
  %v1072 = vand.u32 %v150, 4294901760
  %1073 = vmatprep.subr.mxu0 %v1072
  %v1074 = vand.u32 %v149, 4294901760
  %1075 = vmatpush1.msra.mxu0 %v1074
  %v1076 = vand.u32 %v152, 4294901760
  %1077 = vmatprep.subr.mxu0 %v1076
  %v1078 = vand.u32 %v151, 4294901760
  %1079 = vmatpush1.msra.mxu0 %v1078
  %v1080 = vand.u32 %v154, 4294901760
  %1081 = vmatprep.subr.mxu0 %v1080
  %v1082 = vand.u32 %v153, 4294901760
  %1083 = vmatpush1.msra.mxu0 %v1082
  %v1084 = vand.u32 %v156, 4294901760
  %1085 = vmatprep.subr.mxu0 %v1084
  %v1086 = vand.u32 %v155, 4294901760
  %1087 = vmatpush1.msra.mxu0 %v1086
  %1088 = vmatprep.subr.mxu0 0.0
  %1089 = vmatpush1.msra.mxu0 0.0
  %1090 = vmatprep.subr.mxu0 0.0
  %1091 = vmatpush1.msra.mxu0 0.0
  %1092 = vmatprep.subr.mxu0 0.0
  %1093 = vmatpush1.msra.mxu0 0.0
  %1094 = vmatprep.subr.mxu0 0.0
  %1095 = vmatpush1.msra.mxu0 0.0
  %1096 = vmatprep.subr.mxu0 0.0
  %1097 = vmatpush1.msra.mxu0 0.0
  %1098 = vmatprep.subr.mxu0 0.0
  %1099 = vmatpush1.msra.mxu0 0.0
  %1100 = vmatprep.subr.mxu0 0.0
  %1101 = vmatpush1.msra.mxu0 0.0
  %1102 = vmatprep.subr.mxu0 0.0
  %1103 = vmatpush1.msra.mxu0 0.0
  %1104 = vmatprep.subr.mxu0 0.0
  %1105 = vmatpush1.msra.mxu0 0.0
  %1106 = vmatprep.subr.mxu0 0.0
  %1107 = vmatpush1.msra.mxu0 0.0
  %1108 = vmatprep.subr.mxu0 0.0
  %1109 = vmatpush1.msra.mxu0 0.0
  %1110 = vmatprep.subr.mxu0 0.0
  %1111 = vmatpush1.msra.mxu0 0.0
  %1112 = vmatprep.subr.mxu0 0.0
  %1113 = vmatpush1.msra.mxu0 0.0
  %1114 = vmatprep.subr.mxu0 0.0
  %1115 = vmatpush1.msra.mxu0 0.0
  %1116 = vmatprep.subr.mxu0 0.0
  %1117 = vmatpush1.msra.mxu0 0.0
  %1118 = vmatprep.subr.mxu0 0.0
  %1119 = vmatpush1.msra.mxu0 0.0
  %1120 = vmatprep.mubr.f32.mxu0 0.0
  %v1121 = vand.u32 %v109, 4294901760
  %v1122 = vsub.f32 %v109, %v1121
  %v1123 = vand.u32 %v1122, 4294901760
  %1124 = vmatmul.mubr.f32.gmra.mrb[0].mxu0 %v1123
  %v1125 = vpop.f32.mrb[0].mxu0
  %v1126 = vadd.f32 %v900, %v1125
  %v1127 = vpop.f32.mrb[0].mxu0
  %v1128 = vadd.f32 %v902, %v1127
  %1129 = vmatprep.mubr.f32.mxu0 0.0
  %v1130 = vand.u32 %v110, 4294901760
  %v1131 = vsub.f32 %v110, %v1130
  %v1132 = vand.u32 %v1131, 4294901760
  %1133 = vmatmul.mubr.f32.gmra.mrb[0].mxu0 %v1132
  %v1134 = vpop.f32.mrb[0].mxu0
  %v1135 = vadd.f32 %v908, %v1134
  %v1136 = vpop.f32.mrb[0].mxu0
  %v1137 = vadd.f32 %v910, %v1136
  %1138 = vmatprep.mubr.f32.mxu0 0.0
  %v1139 = vand.u32 %v111, 4294901760
  %v1140 = vsub.f32 %v111, %v1139
  %v1141 = vand.u32 %v1140, 4294901760
  %1142 = vmatmul.mubr.f32.gmra.mrb[0].mxu0 %v1141
  %v1143 = vpop.f32.mrb[0].mxu0
  %v1144 = vadd.f32 %v916, %v1143
  %v1145 = vpop.f32.mrb[0].mxu0
  %v1146 = vadd.f32 %v918, %v1145
  %1147 = vmatprep.mubr.f32.mxu0 0.0
  %v1148 = vand.u32 %v112, 4294901760
  %v1149 = vsub.f32 %v112, %v1148
  %v1150 = vand.u32 %v1149, 4294901760
  %1151 = vmatmul.mubr.f32.gmra.mrb[0].mxu0 %v1150
  %v1152 = vpop.f32.mrb[0].mxu0
  %v1153 = vadd.f32 %v924, %v1152
  %v1154 = vpop.f32.mrb[0].mxu0
  %v1155 = vadd.f32 %v926, %v1154
  %1156 = vmatprep.mubr.f32.mxu0 0.0
  %v1157 = vand.u32 %v113, 4294901760
  %v1158 = vsub.f32 %v113, %v1157
  %v1159 = vand.u32 %v1158, 4294901760
  %1160 = vmatmul.mubr.f32.gmra.mrb[0].mxu0 %v1159
  %v1161 = vpop.f32.mrb[0].mxu0
  %v1162 = vadd.f32 %v932, %v1161
  %v1163 = vpop.f32.mrb[0].mxu0
  %v1164 = vadd.f32 %v934, %v1163
  %1165 = vmatprep.mubr.f32.mxu0 0.0
  %v1166 = vand.u32 %v114, 4294901760
  %v1167 = vsub.f32 %v114, %v1166
  %v1168 = vand.u32 %v1167, 4294901760
  %1169 = vmatmul.mubr.f32.gmra.mrb[0].mxu0 %v1168
  %v1170 = vpop.f32.mrb[0].mxu0
  %v1171 = vadd.f32 %v940, %v1170
  %v1172 = vpop.f32.mrb[0].mxu0
  %v1173 = vadd.f32 %v942, %v1172
  %1174 = vmatprep.mubr.f32.mxu0 0.0
  %v1175 = vand.u32 %v115, 4294901760
  %v1176 = vsub.f32 %v115, %v1175
  %v1177 = vand.u32 %v1176, 4294901760
  %1178 = vmatmul.mubr.f32.gmra.mrb[0].mxu0 %v1177
  %v1179 = vpop.f32.mrb[0].mxu0
  %v1180 = vadd.f32 %v948, %v1179
  %v1181 = vpop.f32.mrb[0].mxu0
  %v1182 = vadd.f32 %v950, %v1181
  %1183 = vmatprep.mubr.f32.mxu0 0.0
  %v1184 = vand.u32 %v116, 4294901760
  %v1185 = vsub.f32 %v116, %v1184
  %v1186 = vand.u32 %v1185, 4294901760
  %1187 = vmatmul.mubr.f32.gmra.mrb[0].mxu0 %v1186
  %v1188 = vpop.f32.mrb[0].mxu0
  %v1189 = vadd.f32 %v956, %v1188
  %v1190 = vpop.f32.mrb[0].mxu0
  %v1191 = vadd.f32 %v958, %v1190
  %1192 = vmatprep.mubr.f32.mxu0 0.0
  %v1193 = vand.u32 %v117, 4294901760
  %v1194 = vsub.f32 %v117, %v1193
  %v1195 = vand.u32 %v1194, 4294901760
  %1196 = vmatmul.mubr.f32.gmra.mrb[0].mxu0 %v1195
  %v1197 = vpop.f32.mrb[0].mxu0
  %v1198 = vadd.f32 %v964, %v1197
  %v1199 = vpop.f32.mrb[0].mxu0
  %v1200 = vadd.f32 %v966, %v1199
  %1201 = vmatprep.mubr.f32.mxu0 0.0
  %v1202 = vand.u32 %v118, 4294901760
  %v1203 = vsub.f32 %v118, %v1202
  %v1204 = vand.u32 %v1203, 4294901760
  %1205 = vmatmul.mubr.f32.gmra.mrb[0].mxu0 %v1204
  %v1206 = vpop.f32.mrb[0].mxu0
  %v1207 = vadd.f32 %v972, %v1206
  %v1208 = vpop.f32.mrb[0].mxu0
  %v1209 = vadd.f32 %v974, %v1208
  %1210 = vmatprep.mubr.f32.mxu0 0.0
  %v1211 = vand.u32 %v119, 4294901760
  %v1212 = vsub.f32 %v119, %v1211
  %v1213 = vand.u32 %v1212, 4294901760
  %1214 = vmatmul.mubr.f32.gmra.mrb[0].mxu0 %v1213
  %v1215 = vpop.f32.mrb[0].mxu0
  %v1216 = vadd.f32 %v980, %v1215
  %v1217 = vpop.f32.mrb[0].mxu0
  %v1218 = vadd.f32 %v982, %v1217
  %1219 = vmatprep.mubr.f32.mxu0 0.0
  %v1220 = vand.u32 %v120, 4294901760
  %v1221 = vsub.f32 %v120, %v1220
  %v1222 = vand.u32 %v1221, 4294901760
  %1223 = vmatmul.mubr.f32.gmra.mrb[0].mxu0 %v1222
  %v1224 = vpop.f32.mrb[0].mxu0
  %v1225 = vadd.f32 %v988, %v1224
  %v1226 = vpop.f32.mrb[0].mxu0
  %v1227 = vadd.f32 %v990, %v1226
  %1228 = vmatprep.mubr.f32.mxu0 0.0
  %v1229 = vand.u32 %v121, 4294901760
  %v1230 = vsub.f32 %v121, %v1229
  %v1231 = vand.u32 %v1230, 4294901760
  %1232 = vmatmul.mubr.f32.gmra.mrb[0].mxu0 %v1231
  %v1233 = vpop.f32.mrb[0].mxu0
  %v1234 = vadd.f32 %v996, %v1233
  %v1235 = vpop.f32.mrb[0].mxu0
  %v1236 = vadd.f32 %v998, %v1235
  %1237 = vmatprep.mubr.f32.mxu0 0.0
  %v1238 = vand.u32 %v122, 4294901760
  %v1239 = vsub.f32 %v122, %v1238
  %v1240 = vand.u32 %v1239, 4294901760
  %1241 = vmatmul.mubr.f32.gmra.mrb[0].mxu0 %v1240
  %v1242 = vpop.f32.mrb[0].mxu0
  %v1243 = vadd.f32 %v1004, %v1242
  %v1244 = vpop.f32.mrb[0].mxu0
  %v1245 = vadd.f32 %v1006, %v1244
  %1246 = vmatprep.mubr.f32.mxu0 0.0
  %v1247 = vand.u32 %v123, 4294901760
  %v1248 = vsub.f32 %v123, %v1247
  %v1249 = vand.u32 %v1248, 4294901760
  %1250 = vmatmul.mubr.f32.gmra.mrb[0].mxu0 %v1249
  %v1251 = vpop.f32.mrb[0].mxu0
  %v1252 = vadd.f32 %v1012, %v1251
  %v1253 = vpop.f32.mrb[0].mxu0
  %v1254 = vadd.f32 %v1014, %v1253
  %1255 = vmatprep.mubr.f32.mxu0 0.0
  %v1256 = vand.u32 %v124, 4294901760
  %v1257 = vsub.f32 %v124, %v1256
  %v1258 = vand.u32 %v1257, 4294901760
  %1259 = vmatmul.mubr.f32.gmra.mrb[0].mxu0 %v1258
  %v1260 = vpop.f32.mrb[0].mxu0
  %v1261 = vadd.f32 %v1020, %v1260
  %v1262 = vpop.f32.mrb[0].mxu0
  %v1263 = vadd.f32 %v1022, %v1262
  %1264 = vdwg.mxu0
  %v1265 = vand.u32 %v126, 4294901760
  %v1266 = vsub.f32 %v126, %v1265
  %v1267 = vand.u32 %v1266, 4294901760
  %1268 = vmatprep.subr.mxu0 %v1267
  %v1269 = vand.u32 %v125, 4294901760
  %v1270 = vsub.f32 %v125, %v1269
  %v1271 = vand.u32 %v1270, 4294901760
  %1272 = vmatpush1.msra.mxu0 %v1271
  %v1273 = vand.u32 %v128, 4294901760
  %v1274 = vsub.f32 %v128, %v1273
  %v1275 = vand.u32 %v1274, 4294901760
  %1276 = vmatprep.subr.mxu0 %v1275
  %v1277 = vand.u32 %v127, 4294901760
  %v1278 = vsub.f32 %v127, %v1277
  %v1279 = vand.u32 %v1278, 4294901760
  %1280 = vmatpush1.msra.mxu0 %v1279
  %v1281 = vand.u32 %v130, 4294901760
  %v1282 = vsub.f32 %v130, %v1281
  %v1283 = vand.u32 %v1282, 4294901760
  %1284 = vmatprep.subr.mxu0 %v1283
  %v1285 = vand.u32 %v129, 4294901760
  %v1286 = vsub.f32 %v129, %v1285
  %v1287 = vand.u32 %v1286, 4294901760
  %1288 = vmatpush1.msra.mxu0 %v1287
  %v1289 = vand.u32 %v132, 4294901760
  %v1290 = vsub.f32 %v132, %v1289
  %v1291 = vand.u32 %v1290, 4294901760
  %1292 = vmatprep.subr.mxu0 %v1291
  %v1293 = vand.u32 %v131, 4294901760
  %v1294 = vsub.f32 %v131, %v1293
  %v1295 = vand.u32 %v1294, 4294901760
  %1296 = vmatpush1.msra.mxu0 %v1295
  %v1297 = vand.u32 %v134, 4294901760
  %v1298 = vsub.f32 %v134, %v1297
  %v1299 = vand.u32 %v1298, 4294901760
  %1300 = vmatprep.subr.mxu0 %v1299
  %v1301 = vand.u32 %v133, 4294901760
  %v1302 = vsub.f32 %v133, %v1301
  %v1303 = vand.u32 %v1302, 4294901760
  %1304 = vmatpush1.msra.mxu0 %v1303
  %v1305 = vand.u32 %v136, 4294901760
  %v1306 = vsub.f32 %v136, %v1305
  %v1307 = vand.u32 %v1306, 4294901760
  %1308 = vmatprep.subr.mxu0 %v1307
  %v1309 = vand.u32 %v135, 4294901760
  %v1310 = vsub.f32 %v135, %v1309
  %v1311 = vand.u32 %v1310, 4294901760
  %1312 = vmatpush1.msra.mxu0 %v1311
  %v1313 = vand.u32 %v138, 4294901760
  %v1314 = vsub.f32 %v138, %v1313
  %v1315 = vand.u32 %v1314, 4294901760
  %1316 = vmatprep.subr.mxu0 %v1315
  %v1317 = vand.u32 %v137, 4294901760
  %v1318 = vsub.f32 %v137, %v1317
  %v1319 = vand.u32 %v1318, 4294901760
  %1320 = vmatpush1.msra.mxu0 %v1319
  %v1321 = vand.u32 %v140, 4294901760
  %v1322 = vsub.f32 %v140, %v1321
  %v1323 = vand.u32 %v1322, 4294901760
  %1324 = vmatprep.subr.mxu0 %v1323
  %v1325 = vand.u32 %v139, 4294901760
  %v1326 = vsub.f32 %v139, %v1325
  %v1327 = vand.u32 %v1326, 4294901760
  %1328 = vmatpush1.msra.mxu0 %v1327
  %v1329 = vand.u32 %v142, 4294901760
  %v1330 = vsub.f32 %v142, %v1329
  %v1331 = vand.u32 %v1330, 4294901760
  %1332 = vmatprep.subr.mxu0 %v1331
  %v1333 = vand.u32 %v141, 4294901760
  %v1334 = vsub.f32 %v141, %v1333
  %v1335 = vand.u32 %v1334, 4294901760
  %1336 = vmatpush1.msra.mxu0 %v1335
  %v1337 = vand.u32 %v144, 4294901760
  %v1338 = vsub.f32 %v144, %v1337
  %v1339 = vand.u32 %v1338, 4294901760
  %1340 = vmatprep.subr.mxu0 %v1339
  %v1341 = vand.u32 %v143, 4294901760
  %v1342 = vsub.f32 %v143, %v1341
  %v1343 = vand.u32 %v1342, 4294901760
  %1344 = vmatpush1.msra.mxu0 %v1343
  %v1345 = vand.u32 %v146, 4294901760
  %v1346 = vsub.f32 %v146, %v1345
  %v1347 = vand.u32 %v1346, 4294901760
  %1348 = vmatprep.subr.mxu0 %v1347
  %v1349 = vand.u32 %v145, 4294901760
  %v1350 = vsub.f32 %v145, %v1349
  %v1351 = vand.u32 %v1350, 4294901760
  %1352 = vmatpush1.msra.mxu0 %v1351
  %v1353 = vand.u32 %v148, 4294901760
  %v1354 = vsub.f32 %v148, %v1353
  %v1355 = vand.u32 %v1354, 4294901760
  %1356 = vmatprep.subr.mxu0 %v1355
  %v1357 = vand.u32 %v147, 4294901760
  %v1358 = vsub.f32 %v147, %v1357
  %v1359 = vand.u32 %v1358, 4294901760
  %1360 = vmatpush1.msra.mxu0 %v1359
  %v1361 = vand.u32 %v150, 4294901760
  %v1362 = vsub.f32 %v150, %v1361
  %v1363 = vand.u32 %v1362, 4294901760
  %1364 = vmatprep.subr.mxu0 %v1363
  %v1365 = vand.u32 %v149, 4294901760
  %v1366 = vsub.f32 %v149, %v1365
  %v1367 = vand.u32 %v1366, 4294901760
  %1368 = vmatpush1.msra.mxu0 %v1367
  %v1369 = vand.u32 %v152, 4294901760
  %v1370 = vsub.f32 %v152, %v1369
  %v1371 = vand.u32 %v1370, 4294901760
  %1372 = vmatprep.subr.mxu0 %v1371
  %v1373 = vand.u32 %v151, 4294901760
  %v1374 = vsub.f32 %v151, %v1373
  %v1375 = vand.u32 %v1374, 4294901760
  %1376 = vmatpush1.msra.mxu0 %v1375
  %v1377 = vand.u32 %v154, 4294901760
  %v1378 = vsub.f32 %v154, %v1377
  %v1379 = vand.u32 %v1378, 4294901760
  %1380 = vmatprep.subr.mxu0 %v1379
  %v1381 = vand.u32 %v153, 4294901760
  %v1382 = vsub.f32 %v153, %v1381
  %v1383 = vand.u32 %v1382, 4294901760
  %1384 = vmatpush1.msra.mxu0 %v1383
  %v1385 = vand.u32 %v156, 4294901760
  %v1386 = vsub.f32 %v156, %v1385
  %v1387 = vand.u32 %v1386, 4294901760
  %1388 = vmatprep.subr.mxu0 %v1387
  %v1389 = vand.u32 %v155, 4294901760
  %v1390 = vsub.f32 %v155, %v1389
  %v1391 = vand.u32 %v1390, 4294901760
  %1392 = vmatpush1.msra.mxu0 %v1391
  %1393 = vmatprep.subr.mxu0 0.0
  %1394 = vmatpush1.msra.mxu0 0.0
  %1395 = vmatprep.subr.mxu0 0.0
  %1396 = vmatpush1.msra.mxu0 0.0
  %1397 = vmatprep.subr.mxu0 0.0
  %1398 = vmatpush1.msra.mxu0 0.0
  %1399 = vmatprep.subr.mxu0 0.0
  %1400 = vmatpush1.msra.mxu0 0.0
  %1401 = vmatprep.subr.mxu0 0.0
  %1402 = vmatpush1.msra.mxu0 0.0
  %1403 = vmatprep.subr.mxu0 0.0
  %1404 = vmatpush1.msra.mxu0 0.0
  %1405 = vmatprep.subr.mxu0 0.0
  %1406 = vmatpush1.msra.mxu0 0.0
  %1407 = vmatprep.subr.mxu0 0.0
  %1408 = vmatpush1.msra.mxu0 0.0
  %1409 = vmatprep.subr.mxu0 0.0
  %1410 = vmatpush1.msra.mxu0 0.0
  %1411 = vmatprep.subr.mxu0 0.0
  %1412 = vmatpush1.msra.mxu0 0.0
  %1413 = vmatprep.subr.mxu0 0.0
  %1414 = vmatpush1.msra.mxu0 0.0
  %1415 = vmatprep.subr.mxu0 0.0
  %1416 = vmatpush1.msra.mxu0 0.0
  %1417 = vmatprep.subr.mxu0 0.0
  %1418 = vmatpush1.msra.mxu0 0.0
  %1419 = vmatprep.subr.mxu0 0.0
  %1420 = vmatpush1.msra.mxu0 0.0
  %1421 = vmatprep.subr.mxu0 0.0
  %1422 = vmatpush1.msra.mxu0 0.0
  %1423 = vmatprep.subr.mxu0 0.0
  %1424 = vmatpush1.msra.mxu0 0.0
  %1425 = vmatprep.mubr.f32.mxu0 0.0
  %v1426 = vand.u32 %v109, 4294901760
  %1427 = vmatmul.mubr.f32.gmra.mrb[0].mxu0 %v1426
  %v1428 = vpop.f32.mrb[0].mxu0
  %v1429 = vadd.f32 %v1126, %v1428
  %v1430 = vpop.f32.mrb[0].mxu0
  %v1431 = vadd.f32 %v1128, %v1430
  %1432 = vmatprep.mubr.f32.mxu0 0.0
  %v1433 = vand.u32 %v110, 4294901760
  %1434 = vmatmul.mubr.f32.gmra.mrb[0].mxu0 %v1433
  %v1435 = vpop.f32.mrb[0].mxu0
  %v1436 = vadd.f32 %v1135, %v1435
  %v1437 = vpop.f32.mrb[0].mxu0
  %v1438 = vadd.f32 %v1137, %v1437
  %1439 = vmatprep.mubr.f32.mxu0 0.0
  %v1440 = vand.u32 %v111, 4294901760
  %1441 = vmatmul.mubr.f32.gmra.mrb[0].mxu0 %v1440
  %v1442 = vpop.f32.mrb[0].mxu0
  %v1443 = vadd.f32 %v1144, %v1442
  %v1444 = vpop.f32.mrb[0].mxu0
  %v1445 = vadd.f32 %v1146, %v1444
  %1446 = vmatprep.mubr.f32.mxu0 0.0
  %v1447 = vand.u32 %v112, 4294901760
  %1448 = vmatmul.mubr.f32.gmra.mrb[0].mxu0 %v1447
  %v1449 = vpop.f32.mrb[0].mxu0
  %v1450 = vadd.f32 %v1153, %v1449
  %v1451 = vpop.f32.mrb[0].mxu0
  %v1452 = vadd.f32 %v1155, %v1451
  %1453 = vmatprep.mubr.f32.mxu0 0.0
  %v1454 = vand.u32 %v113, 4294901760
  %1455 = vmatmul.mubr.f32.gmra.mrb[0].mxu0 %v1454
  %v1456 = vpop.f32.mrb[0].mxu0
  %v1457 = vadd.f32 %v1162, %v1456
  %v1458 = vpop.f32.mrb[0].mxu0
  %v1459 = vadd.f32 %v1164, %v1458
  %1460 = vmatprep.mubr.f32.mxu0 0.0
  %v1461 = vand.u32 %v114, 4294901760
  %1462 = vmatmul.mubr.f32.gmra.mrb[0].mxu0 %v1461
  %v1463 = vpop.f32.mrb[0].mxu0
  %v1464 = vadd.f32 %v1171, %v1463
  %v1465 = vpop.f32.mrb[0].mxu0
  %v1466 = vadd.f32 %v1173, %v1465
  %1467 = vmatprep.mubr.f32.mxu0 0.0
  %v1468 = vand.u32 %v115, 4294901760
  %1469 = vmatmul.mubr.f32.gmra.mrb[0].mxu0 %v1468
  %v1470 = vpop.f32.mrb[0].mxu0
  %v1471 = vadd.f32 %v1180, %v1470
  %v1472 = vpop.f32.mrb[0].mxu0
  %v1473 = vadd.f32 %v1182, %v1472
  %1474 = vmatprep.mubr.f32.mxu0 0.0
  %v1475 = vand.u32 %v116, 4294901760
  %1476 = vmatmul.mubr.f32.gmra.mrb[0].mxu0 %v1475
  %v1477 = vpop.f32.mrb[0].mxu0
  %v1478 = vadd.f32 %v1189, %v1477
  %v1479 = vpop.f32.mrb[0].mxu0
  %v1480 = vadd.f32 %v1191, %v1479
  %1481 = vmatprep.mubr.f32.mxu0 0.0
  %v1482 = vand.u32 %v117, 4294901760
  %1483 = vmatmul.mubr.f32.gmra.mrb[0].mxu0 %v1482
  %v1484 = vpop.f32.mrb[0].mxu0
  %v1485 = vadd.f32 %v1198, %v1484
  %v1486 = vpop.f32.mrb[0].mxu0
  %v1487 = vadd.f32 %v1200, %v1486
  %1488 = vmatprep.mubr.f32.mxu0 0.0
  %v1489 = vand.u32 %v118, 4294901760
  %1490 = vmatmul.mubr.f32.gmra.mrb[0].mxu0 %v1489
  %v1491 = vpop.f32.mrb[0].mxu0
  %v1492 = vadd.f32 %v1207, %v1491
  %v1493 = vpop.f32.mrb[0].mxu0
  %v1494 = vadd.f32 %v1209, %v1493
  %1495 = vmatprep.mubr.f32.mxu0 0.0
  %v1496 = vand.u32 %v119, 4294901760
  %1497 = vmatmul.mubr.f32.gmra.mrb[0].mxu0 %v1496
  %v1498 = vpop.f32.mrb[0].mxu0
  %v1499 = vadd.f32 %v1216, %v1498
  %v1500 = vpop.f32.mrb[0].mxu0
  %v1501 = vadd.f32 %v1218, %v1500
  %1502 = vmatprep.mubr.f32.mxu0 0.0
  %v1503 = vand.u32 %v120, 4294901760
  %1504 = vmatmul.mubr.f32.gmra.mrb[0].mxu0 %v1503
  %v1505 = vpop.f32.mrb[0].mxu0
  %v1506 = vadd.f32 %v1225, %v1505
  %v1507 = vpop.f32.mrb[0].mxu0
  %v1508 = vadd.f32 %v1227, %v1507
  %1509 = vmatprep.mubr.f32.mxu0 0.0
  %v1510 = vand.u32 %v121, 4294901760
  %1511 = vmatmul.mubr.f32.gmra.mrb[0].mxu0 %v1510
  %v1512 = vpop.f32.mrb[0].mxu0
  %v1513 = vadd.f32 %v1234, %v1512
  %v1514 = vpop.f32.mrb[0].mxu0
  %v1515 = vadd.f32 %v1236, %v1514
  %1516 = vmatprep.mubr.f32.mxu0 0.0
  %v1517 = vand.u32 %v122, 4294901760
  %1518 = vmatmul.mubr.f32.gmra.mrb[0].mxu0 %v1517
  %v1519 = vpop.f32.mrb[0].mxu0
  %v1520 = vadd.f32 %v1243, %v1519
  %v1521 = vpop.f32.mrb[0].mxu0
  %v1522 = vadd.f32 %v1245, %v1521
  %1523 = vmatprep.mubr.f32.mxu0 0.0
  %v1524 = vand.u32 %v123, 4294901760
  %1525 = vmatmul.mubr.f32.gmra.mrb[0].mxu0 %v1524
  %v1526 = vpop.f32.mrb[0].mxu0
  %v1527 = vadd.f32 %v1252, %v1526
  %v1528 = vpop.f32.mrb[0].mxu0
  %v1529 = vadd.f32 %v1254, %v1528
  %1530 = vmatprep.mubr.f32.mxu0 0.0
  %v1531 = vand.u32 %v124, 4294901760
  %1532 = vmatmul.mubr.f32.gmra.mrb[0].mxu0 %v1531
  %v1533 = vpop.f32.mrb[0].mxu0
  %v1534 = vadd.f32 %v1261, %v1533
  %v1535 = vpop.f32.mrb[0].mxu0
  %v1536 = vadd.f32 %v1263, %v1535
  %1537 = vdwg.mxu0
  %v1538 = vand.u32 %v126, 4294901760
  %1539 = vmatprep.subr.mxu0 %v1538
  %v1540 = vand.u32 %v125, 4294901760
  %1541 = vmatpush1.msra.mxu0 %v1540
  %v1542 = vand.u32 %v128, 4294901760
  %1543 = vmatprep.subr.mxu0 %v1542
  %v1544 = vand.u32 %v127, 4294901760
  %1545 = vmatpush1.msra.mxu0 %v1544
  %v1546 = vand.u32 %v130, 4294901760
  %1547 = vmatprep.subr.mxu0 %v1546
  %v1548 = vand.u32 %v129, 4294901760
  %1549 = vmatpush1.msra.mxu0 %v1548
  %v1550 = vand.u32 %v132, 4294901760
  %1551 = vmatprep.subr.mxu0 %v1550
  %v1552 = vand.u32 %v131, 4294901760
  %1553 = vmatpush1.msra.mxu0 %v1552
  %v1554 = vand.u32 %v134, 4294901760
  %1555 = vmatprep.subr.mxu0 %v1554
  %v1556 = vand.u32 %v133, 4294901760
  %1557 = vmatpush1.msra.mxu0 %v1556
  %v1558 = vand.u32 %v136, 4294901760
  %1559 = vmatprep.subr.mxu0 %v1558
  %v1560 = vand.u32 %v135, 4294901760
  %1561 = vmatpush1.msra.mxu0 %v1560
  %v1562 = vand.u32 %v138, 4294901760
  %1563 = vmatprep.subr.mxu0 %v1562
  %v1564 = vand.u32 %v137, 4294901760
  %1565 = vmatpush1.msra.mxu0 %v1564
  %v1566 = vand.u32 %v140, 4294901760
  %1567 = vmatprep.subr.mxu0 %v1566
  %v1568 = vand.u32 %v139, 4294901760
  %1569 = vmatpush1.msra.mxu0 %v1568
  %v1570 = vand.u32 %v142, 4294901760
  %1571 = vmatprep.subr.mxu0 %v1570
  %v1572 = vand.u32 %v141, 4294901760
  %1573 = vmatpush1.msra.mxu0 %v1572
  %v1574 = vand.u32 %v144, 4294901760
  %1575 = vmatprep.subr.mxu0 %v1574
  %v1576 = vand.u32 %v143, 4294901760
  %1577 = vmatpush1.msra.mxu0 %v1576
  %v1578 = vand.u32 %v146, 4294901760
  %1579 = vmatprep.subr.mxu0 %v1578
  %v1580 = vand.u32 %v145, 4294901760
  %1581 = vmatpush1.msra.mxu0 %v1580
  %v1582 = vand.u32 %v148, 4294901760
  %1583 = vmatprep.subr.mxu0 %v1582
  %v1584 = vand.u32 %v147, 4294901760
  %1585 = vmatpush1.msra.mxu0 %v1584
  %v1586 = vand.u32 %v150, 4294901760
  %1587 = vmatprep.subr.mxu0 %v1586
  %v1588 = vand.u32 %v149, 4294901760
  %1589 = vmatpush1.msra.mxu0 %v1588
  %v1590 = vand.u32 %v152, 4294901760
  %1591 = vmatprep.subr.mxu0 %v1590
  %v1592 = vand.u32 %v151, 4294901760
  %1593 = vmatpush1.msra.mxu0 %v1592
  %v1594 = vand.u32 %v154, 4294901760
  %1595 = vmatprep.subr.mxu0 %v1594
  %v1596 = vand.u32 %v153, 4294901760
  %1597 = vmatpush1.msra.mxu0 %v1596
  %v1598 = vand.u32 %v156, 4294901760
  %1599 = vmatprep.subr.mxu0 %v1598
  %v1600 = vand.u32 %v155, 4294901760
  %1601 = vmatpush1.msra.mxu0 %v1600
  %1602 = vmatprep.subr.mxu0 0.0
  %1603 = vmatpush1.msra.mxu0 0.0
  %1604 = vmatprep.subr.mxu0 0.0
  %1605 = vmatpush1.msra.mxu0 0.0
  %1606 = vmatprep.subr.mxu0 0.0
  %1607 = vmatpush1.msra.mxu0 0.0
  %1608 = vmatprep.subr.mxu0 0.0
  %1609 = vmatpush1.msra.mxu0 0.0
  %1610 = vmatprep.subr.mxu0 0.0
  %1611 = vmatpush1.msra.mxu0 0.0
  %1612 = vmatprep.subr.mxu0 0.0
  %1613 = vmatpush1.msra.mxu0 0.0
  %1614 = vmatprep.subr.mxu0 0.0
  %1615 = vmatpush1.msra.mxu0 0.0
  %1616 = vmatprep.subr.mxu0 0.0
  %1617 = vmatpush1.msra.mxu0 0.0
  %1618 = vmatprep.subr.mxu0 0.0
  %1619 = vmatpush1.msra.mxu0 0.0
  %1620 = vmatprep.subr.mxu0 0.0
  %1621 = vmatpush1.msra.mxu0 0.0
  %1622 = vmatprep.subr.mxu0 0.0
  %1623 = vmatpush1.msra.mxu0 0.0
  %1624 = vmatprep.subr.mxu0 0.0
  %1625 = vmatpush1.msra.mxu0 0.0
  %1626 = vmatprep.subr.mxu0 0.0
  %1627 = vmatpush1.msra.mxu0 0.0
  %1628 = vmatprep.subr.mxu0 0.0
  %1629 = vmatpush1.msra.mxu0 0.0
  %1630 = vmatprep.subr.mxu0 0.0
  %1631 = vmatpush1.msra.mxu0 0.0
  %1632 = vmatprep.subr.mxu0 0.0
  %1633 = vmatpush1.msra.mxu0 0.0
  %1634 = vmatprep.mubr.f32.mxu0 0.0
  %v1635 = vand.u32 %v109, 4294901760
  %1636 = vmatmul.mubr.f32.gmra.mrb[0].mxu0 %v1635
  %v1637 = vpop.f32.mrb[0].mxu0
  %v1638 = vadd.f32 %v1429, %v1637
  %v1639 = vpop.f32.mrb[0].mxu0
  %v1640 = vadd.f32 %v1431, %v1639
  %1641 = vmatprep.mubr.f32.mxu0 0.0
  %v1642 = vand.u32 %v110, 4294901760
  %1643 = vmatmul.mubr.f32.gmra.mrb[0].mxu0 %v1642
  %v1644 = vpop.f32.mrb[0].mxu0
  %v1645 = vadd.f32 %v1436, %v1644
  %v1646 = vpop.f32.mrb[0].mxu0
  %v1647 = vadd.f32 %v1438, %v1646
  %1648 = vmatprep.mubr.f32.mxu0 0.0
  %v1649 = vand.u32 %v111, 4294901760
  %1650 = vmatmul.mubr.f32.gmra.mrb[0].mxu0 %v1649
  %v1651 = vpop.f32.mrb[0].mxu0
  %v1652 = vadd.f32 %v1443, %v1651
  %v1653 = vpop.f32.mrb[0].mxu0
  %v1654 = vadd.f32 %v1445, %v1653
  %1655 = vmatprep.mubr.f32.mxu0 0.0
  %v1656 = vand.u32 %v112, 4294901760
  %1657 = vmatmul.mubr.f32.gmra.mrb[0].mxu0 %v1656
  %v1658 = vpop.f32.mrb[0].mxu0
  %v1659 = vadd.f32 %v1450, %v1658
  %v1660 = vpop.f32.mrb[0].mxu0
  %v1661 = vadd.f32 %v1452, %v1660
  %1662 = vmatprep.mubr.f32.mxu0 0.0
  %v1663 = vand.u32 %v113, 4294901760
  %1664 = vmatmul.mubr.f32.gmra.mrb[0].mxu0 %v1663
  %v1665 = vpop.f32.mrb[0].mxu0
  %v1666 = vadd.f32 %v1457, %v1665
  %v1667 = vpop.f32.mrb[0].mxu0
  %v1668 = vadd.f32 %v1459, %v1667
  %1669 = vmatprep.mubr.f32.mxu0 0.0
  %v1670 = vand.u32 %v114, 4294901760
  %1671 = vmatmul.mubr.f32.gmra.mrb[0].mxu0 %v1670
  %v1672 = vpop.f32.mrb[0].mxu0
  %v1673 = vadd.f32 %v1464, %v1672
  %v1674 = vpop.f32.mrb[0].mxu0
  %v1675 = vadd.f32 %v1466, %v1674
  %1676 = vmatprep.mubr.f32.mxu0 0.0
  %v1677 = vand.u32 %v115, 4294901760
  %1678 = vmatmul.mubr.f32.gmra.mrb[0].mxu0 %v1677
  %v1679 = vpop.f32.mrb[0].mxu0
  %v1680 = vadd.f32 %v1471, %v1679
  %v1681 = vpop.f32.mrb[0].mxu0
  %v1682 = vadd.f32 %v1473, %v1681
  %1683 = vmatprep.mubr.f32.mxu0 0.0
  %v1684 = vand.u32 %v116, 4294901760
  %1685 = vmatmul.mubr.f32.gmra.mrb[0].mxu0 %v1684
  %v1686 = vpop.f32.mrb[0].mxu0
  %v1687 = vadd.f32 %v1478, %v1686
  %v1688 = vpop.f32.mrb[0].mxu0
  %v1689 = vadd.f32 %v1480, %v1688
  %1690 = vmatprep.mubr.f32.mxu0 0.0
  %v1691 = vand.u32 %v117, 4294901760
  %1692 = vmatmul.mubr.f32.gmra.mrb[0].mxu0 %v1691
  %v1693 = vpop.f32.mrb[0].mxu0
  %v1694 = vadd.f32 %v1485, %v1693
  %v1695 = vpop.f32.mrb[0].mxu0
  %v1696 = vadd.f32 %v1487, %v1695
  %1697 = vmatprep.mubr.f32.mxu0 0.0
  %v1698 = vand.u32 %v118, 4294901760
  %1699 = vmatmul.mubr.f32.gmra.mrb[0].mxu0 %v1698
  %v1700 = vpop.f32.mrb[0].mxu0
  %v1701 = vadd.f32 %v1492, %v1700
  %v1702 = vpop.f32.mrb[0].mxu0
  %v1703 = vadd.f32 %v1494, %v1702
  %1704 = vmatprep.mubr.f32.mxu0 0.0
  %v1705 = vand.u32 %v119, 4294901760
  %1706 = vmatmul.mubr.f32.gmra.mrb[0].mxu0 %v1705
  %v1707 = vpop.f32.mrb[0].mxu0
  %v1708 = vadd.f32 %v1499, %v1707
  %v1709 = vpop.f32.mrb[0].mxu0
  %v1710 = vadd.f32 %v1501, %v1709
  %1711 = vmatprep.mubr.f32.mxu0 0.0
  %v1712 = vand.u32 %v120, 4294901760
  %1713 = vmatmul.mubr.f32.gmra.mrb[0].mxu0 %v1712
  %v1714 = vpop.f32.mrb[0].mxu0
  %v1715 = vadd.f32 %v1506, %v1714
  %v1716 = vpop.f32.mrb[0].mxu0
  %v1717 = vadd.f32 %v1508, %v1716
  %1718 = vmatprep.mubr.f32.mxu0 0.0
  %v1719 = vand.u32 %v121, 4294901760
  %1720 = vmatmul.mubr.f32.gmra.mrb[0].mxu0 %v1719
  %v1721 = vpop.f32.mrb[0].mxu0
  %v1722 = vadd.f32 %v1513, %v1721
  %v1723 = vpop.f32.mrb[0].mxu0
  %v1724 = vadd.f32 %v1515, %v1723
  %1725 = vmatprep.mubr.f32.mxu0 0.0
  %v1726 = vand.u32 %v122, 4294901760
  %1727 = vmatmul.mubr.f32.gmra.mrb[0].mxu0 %v1726
  %v1728 = vpop.f32.mrb[0].mxu0
  %v1729 = vadd.f32 %v1520, %v1728
  %v1730 = vpop.f32.mrb[0].mxu0
  %v1731 = vadd.f32 %v1522, %v1730
  %1732 = vmatprep.mubr.f32.mxu0 0.0
  %v1733 = vand.u32 %v123, 4294901760
  %1734 = vmatmul.mubr.f32.gmra.mrb[0].mxu0 %v1733
  %v1735 = vpop.f32.mrb[0].mxu0
  %v1736 = vadd.f32 %v1527, %v1735
  %v1737 = vpop.f32.mrb[0].mxu0
  %v1738 = vadd.f32 %v1529, %v1737
  %1739 = vmatprep.mubr.f32.mxu0 0.0
  %v1740 = vand.u32 %v124, 4294901760
  %1741 = vmatmul.mubr.f32.gmra.mrb[0].mxu0 %v1740
  %v1742 = vpop.f32.mrb[0].mxu0
  %v1743 = vadd.f32 %v1534, %v1742
  %v1744 = vpop.f32.mrb[0].mxu0
  %v1745 = vadd.f32 %v1536, %v1744
  %1746 = vdwg.mxu0
  %v1747 = vmul.f32 %v1638, %v1638
  %v1748 = vmul.f32 %v1640, %v1640
  %v1749 = vmul.f32 %v1645, %v1645
  %v1750 = vmul.f32 %v1647, %v1647
  %v1751 = vmul.f32 %v1652, %v1652
  %v1752 = vmul.f32 %v1654, %v1654
  %v1753 = vmul.f32 %v1659, %v1659
  %v1754 = vmul.f32 %v1661, %v1661
  %v1755 = vmul.f32 %v1666, %v1666
  %v1756 = vmul.f32 %v1668, %v1668
  %v1757 = vmul.f32 %v1673, %v1673
  %v1758 = vmul.f32 %v1675, %v1675
  %v1759 = vmul.f32 %v1680, %v1680
  %v1760 = vmul.f32 %v1682, %v1682
  %v1761 = vmul.f32 %v1687, %v1687
  %v1762 = vmul.f32 %v1689, %v1689
  %v1763 = vmul.f32 %v1694, %v1694
  %v1764 = vmul.f32 %v1696, %v1696
  %v1765 = vmul.f32 %v1701, %v1701
  %v1766 = vmul.f32 %v1703, %v1703
  %v1767 = vmul.f32 %v1708, %v1708
  %v1768 = vmul.f32 %v1710, %v1710
  %v1769 = vmul.f32 %v1715, %v1715
  %v1770 = vmul.f32 %v1717, %v1717
  %v1771 = vmul.f32 %v1722, %v1722
  %v1772 = vmul.f32 %v1724, %v1724
  %v1773 = vmul.f32 %v1729, %v1729
  %v1774 = vmul.f32 %v1731, %v1731
  %v1775 = vmul.f32 %v1736, %v1736
  %v1776 = vmul.f32 %v1738, %v1738
  %v1777 = vmul.f32 %v1743, %v1743
  %v1778 = vmul.f32 %v1745, %v1745
  %vm1779 = vcmask 588800
  %v1780 = vsel %vm1779, %v1748, 0.0
  %v1781 = vadd.f32 %v1747, %v1780
  %1782 = vadd.xlane.f32.xlu0 %v1781
  %v1783 = vpop.xlane.xlu0 %1782
  %v1784 = vsel %vm1779, %v1750, 0.0
  %v1785 = vadd.f32 %v1749, %v1784
  %1786 = vadd.xlane.f32.xlu0 %v1785
  %v1787 = vpop.xlane.xlu0 %1786
  %v1788 = vsel %vm1779, %v1752, 0.0
  %v1789 = vadd.f32 %v1751, %v1788
  %1790 = vadd.xlane.f32.xlu0 %v1789
  %v1791 = vpop.xlane.xlu0 %1790
  %v1792 = vsel %vm1779, %v1754, 0.0
  %v1793 = vadd.f32 %v1753, %v1792
  %1794 = vadd.xlane.f32.xlu0 %v1793
  %v1795 = vpop.xlane.xlu0 %1794
  %v1796 = vsel %vm1779, %v1756, 0.0
  %v1797 = vadd.f32 %v1755, %v1796
  %1798 = vadd.xlane.f32.xlu0 %v1797
  %v1799 = vpop.xlane.xlu0 %1798
  %v1800 = vsel %vm1779, %v1758, 0.0
  %v1801 = vadd.f32 %v1757, %v1800
  %1802 = vadd.xlane.f32.xlu0 %v1801
  %v1803 = vpop.xlane.xlu0 %1802
  %v1804 = vsel %vm1779, %v1760, 0.0
  %v1805 = vadd.f32 %v1759, %v1804
  %1806 = vadd.xlane.f32.xlu0 %v1805
  %v1807 = vpop.xlane.xlu0 %1806
  %v1808 = vsel %vm1779, %v1762, 0.0
  %v1809 = vadd.f32 %v1761, %v1808
  %1810 = vadd.xlane.f32.xlu0 %v1809
  %v1811 = vpop.xlane.xlu0 %1810
  %v1812 = vsel %vm1779, %v1764, 0.0
  %v1813 = vadd.f32 %v1763, %v1812
  %1814 = vadd.xlane.f32.xlu0 %v1813
  %v1815 = vpop.xlane.xlu0 %1814
  %v1816 = vsel %vm1779, %v1766, 0.0
  %v1817 = vadd.f32 %v1765, %v1816
  %1818 = vadd.xlane.f32.xlu0 %v1817
  %v1819 = vpop.xlane.xlu0 %1818
  %v1820 = vsel %vm1779, %v1768, 0.0
  %v1821 = vadd.f32 %v1767, %v1820
  %1822 = vadd.xlane.f32.xlu0 %v1821
  %v1823 = vpop.xlane.xlu0 %1822
  %v1824 = vsel %vm1779, %v1770, 0.0
  %v1825 = vadd.f32 %v1769, %v1824
  %1826 = vadd.xlane.f32.xlu0 %v1825
  %v1827 = vpop.xlane.xlu0 %1826
  %v1828 = vsel %vm1779, %v1772, 0.0
  %v1829 = vadd.f32 %v1771, %v1828
  %1830 = vadd.xlane.f32.xlu0 %v1829
  %v1831 = vpop.xlane.xlu0 %1830
  %v1832 = vsel %vm1779, %v1774, 0.0
  %v1833 = vadd.f32 %v1773, %v1832
  %1834 = vadd.xlane.f32.xlu0 %v1833
  %v1835 = vpop.xlane.xlu0 %1834
  %v1836 = vsel %vm1779, %v1776, 0.0
  %v1837 = vadd.f32 %v1775, %v1836
  %1838 = vadd.xlane.f32.xlu0 %v1837
  %v1839 = vpop.xlane.xlu0 %1838
  %v1840 = vsel %vm1779, %v1778, 0.0
  %v1841 = vadd.f32 %v1777, %v1840
  %1842 = vadd.xlane.f32.xlu0 %v1841
  %v1843 = vpop.xlane.xlu0 %1842
  %v1844 = vrsqrt.pop %v1783
  %v1845 = vmul.f32 %v1783, %v1844
  %vm1846 = vcmp.eq.f32.partialorder %v1783, inf
  %v1847 = vsel %vm1846, %v1783, %v1845
  %vm1848 = vcmp.eq.f32.partialorder %v1783, 0.0
  %v1849 = vand.u32 %v1783, 2147483648
  %v1850 = vsel %vm1848, %v1849, %v1847
  %v1851 = vrsqrt.pop %v1787
  %v1852 = vmul.f32 %v1787, %v1851
  %vm1853 = vcmp.eq.f32.partialorder %v1787, inf
  %v1854 = vsel %vm1853, %v1787, %v1852
  %vm1855 = vcmp.eq.f32.partialorder %v1787, 0.0
  %v1856 = vand.u32 %v1787, 2147483648
  %v1857 = vsel %vm1855, %v1856, %v1854
  %v1858 = vrsqrt.pop %v1791
  %v1859 = vmul.f32 %v1791, %v1858
  %vm1860 = vcmp.eq.f32.partialorder %v1791, inf
  %v1861 = vsel %vm1860, %v1791, %v1859
  %vm1862 = vcmp.eq.f32.partialorder %v1791, 0.0
  %v1863 = vand.u32 %v1791, 2147483648
  %v1864 = vsel %vm1862, %v1863, %v1861
  %v1865 = vrsqrt.pop %v1795
  %v1866 = vmul.f32 %v1795, %v1865
  %vm1867 = vcmp.eq.f32.partialorder %v1795, inf
  %v1868 = vsel %vm1867, %v1795, %v1866
  %vm1869 = vcmp.eq.f32.partialorder %v1795, 0.0
  %v1870 = vand.u32 %v1795, 2147483648
  %v1871 = vsel %vm1869, %v1870, %v1868
  %v1872 = vrsqrt.pop %v1799
  %v1873 = vmul.f32 %v1799, %v1872
  %vm1874 = vcmp.eq.f32.partialorder %v1799, inf
  %v1875 = vsel %vm1874, %v1799, %v1873
  %vm1876 = vcmp.eq.f32.partialorder %v1799, 0.0
  %v1877 = vand.u32 %v1799, 2147483648
  %v1878 = vsel %vm1876, %v1877, %v1875
  %v1879 = vrsqrt.pop %v1803
  %v1880 = vmul.f32 %v1803, %v1879
  %vm1881 = vcmp.eq.f32.partialorder %v1803, inf
  %v1882 = vsel %vm1881, %v1803, %v1880
  %vm1883 = vcmp.eq.f32.partialorder %v1803, 0.0
  %v1884 = vand.u32 %v1803, 2147483648
  %v1885 = vsel %vm1883, %v1884, %v1882
  %v1886 = vrsqrt.pop %v1807
  %v1887 = vmul.f32 %v1807, %v1886
  %vm1888 = vcmp.eq.f32.partialorder %v1807, inf
  %v1889 = vsel %vm1888, %v1807, %v1887
  %vm1890 = vcmp.eq.f32.partialorder %v1807, 0.0
  %v1891 = vand.u32 %v1807, 2147483648
  %v1892 = vsel %vm1890, %v1891, %v1889
  %v1893 = vrsqrt.pop %v1811
  %v1894 = vmul.f32 %v1811, %v1893
  %vm1895 = vcmp.eq.f32.partialorder %v1811, inf
  %v1896 = vsel %vm1895, %v1811, %v1894
  %vm1897 = vcmp.eq.f32.partialorder %v1811, 0.0
  %v1898 = vand.u32 %v1811, 2147483648
  %v1899 = vsel %vm1897, %v1898, %v1896
  %v1900 = vrsqrt.pop %v1815
  %v1901 = vmul.f32 %v1815, %v1900
  %vm1902 = vcmp.eq.f32.partialorder %v1815, inf
  %v1903 = vsel %vm1902, %v1815, %v1901
  %vm1904 = vcmp.eq.f32.partialorder %v1815, 0.0
  %v1905 = vand.u32 %v1815, 2147483648
  %v1906 = vsel %vm1904, %v1905, %v1903
  %v1907 = vrsqrt.pop %v1819
  %v1908 = vmul.f32 %v1819, %v1907
  %vm1909 = vcmp.eq.f32.partialorder %v1819, inf
  %v1910 = vsel %vm1909, %v1819, %v1908
  %vm1911 = vcmp.eq.f32.partialorder %v1819, 0.0
  %v1912 = vand.u32 %v1819, 2147483648
  %v1913 = vsel %vm1911, %v1912, %v1910
  %v1914 = vrsqrt.pop %v1823
  %v1915 = vmul.f32 %v1823, %v1914
  %vm1916 = vcmp.eq.f32.partialorder %v1823, inf
  %v1917 = vsel %vm1916, %v1823, %v1915
  %vm1918 = vcmp.eq.f32.partialorder %v1823, 0.0
  %v1919 = vand.u32 %v1823, 2147483648
  %v1920 = vsel %vm1918, %v1919, %v1917
  %v1921 = vrsqrt.pop %v1827
  %v1922 = vmul.f32 %v1827, %v1921
  %vm1923 = vcmp.eq.f32.partialorder %v1827, inf
  %v1924 = vsel %vm1923, %v1827, %v1922
  %vm1925 = vcmp.eq.f32.partialorder %v1827, 0.0
  %v1926 = vand.u32 %v1827, 2147483648
  %v1927 = vsel %vm1925, %v1926, %v1924
  %v1928 = vrsqrt.pop %v1831
  %v1929 = vmul.f32 %v1831, %v1928
  %vm1930 = vcmp.eq.f32.partialorder %v1831, inf
  %v1931 = vsel %vm1930, %v1831, %v1929
  %vm1932 = vcmp.eq.f32.partialorder %v1831, 0.0
  %v1933 = vand.u32 %v1831, 2147483648
  %v1934 = vsel %vm1932, %v1933, %v1931
  %v1935 = vrsqrt.pop %v1835
  %v1936 = vmul.f32 %v1835, %v1935
  %vm1937 = vcmp.eq.f32.partialorder %v1835, inf
  %v1938 = vsel %vm1937, %v1835, %v1936
  %vm1939 = vcmp.eq.f32.partialorder %v1835, 0.0
  %v1940 = vand.u32 %v1835, 2147483648
  %v1941 = vsel %vm1939, %v1940, %v1938
  %v1942 = vrsqrt.pop %v1839
  %v1943 = vmul.f32 %v1839, %v1942
  %vm1944 = vcmp.eq.f32.partialorder %v1839, inf
  %v1945 = vsel %vm1944, %v1839, %v1943
  %vm1946 = vcmp.eq.f32.partialorder %v1839, 0.0
  %v1947 = vand.u32 %v1839, 2147483648
  %v1948 = vsel %vm1946, %v1947, %v1945
  %v1949 = vrsqrt.pop %v1843
  %v1950 = vmul.f32 %v1843, %v1949
  %vm1951 = vcmp.eq.f32.partialorder %v1843, inf
  %v1952 = vsel %vm1951, %v1843, %v1950
  %vm1953 = vcmp.eq.f32.partialorder %v1843, 0.0
  %v1954 = vand.u32 %v1843, 2147483648
  %v1955 = vsel %vm1953, %v1954, %v1952
  %vm1956 = vcmp.gt.f32.partialorder %v1850, 1.0
  %vm1957 = vcmp.gt.f32.partialorder %v1857, 1.0
  %vm1958 = vcmp.gt.f32.partialorder %v1864, 1.0
  %vm1959 = vcmp.gt.f32.partialorder %v1871, 1.0
  %vm1960 = vcmp.gt.f32.partialorder %v1878, 1.0
  %vm1961 = vcmp.gt.f32.partialorder %v1885, 1.0
  %vm1962 = vcmp.gt.f32.partialorder %v1892, 1.0
  %vm1963 = vcmp.gt.f32.partialorder %v1899, 1.0
  %vm1964 = vcmp.gt.f32.partialorder %v1906, 1.0
  %vm1965 = vcmp.gt.f32.partialorder %v1913, 1.0
  %vm1966 = vcmp.gt.f32.partialorder %v1920, 1.0
  %vm1967 = vcmp.gt.f32.partialorder %v1927, 1.0
  %vm1968 = vcmp.gt.f32.partialorder %v1934, 1.0
  %vm1969 = vcmp.gt.f32.partialorder %v1941, 1.0
  %vm1970 = vcmp.gt.f32.partialorder %v1948, 1.0
  %vm1971 = vcmp.gt.f32.partialorder %v1955, 1.0
  %v1972 = vadd.f32 %v1850, 1e-07
  %v1973 = vadd.f32 %v1857, 1e-07
  %v1974 = vadd.f32 %v1864, 1e-07
  %v1975 = vadd.f32 %v1871, 1e-07
  %v1976 = vadd.f32 %v1878, 1e-07
  %v1977 = vadd.f32 %v1885, 1e-07
  %v1978 = vadd.f32 %v1892, 1e-07
  %v1979 = vadd.f32 %v1899, 1e-07
  %v1980 = vadd.f32 %v1906, 1e-07
  %v1981 = vadd.f32 %v1913, 1e-07
  %v1982 = vadd.f32 %v1920, 1e-07
  %v1983 = vadd.f32 %v1927, 1e-07
  %v1984 = vadd.f32 %v1934, 1e-07
  %v1985 = vadd.f32 %v1941, 1e-07
  %v1986 = vadd.f32 %v1948, 1e-07
  %v1987 = vadd.f32 %v1955, 1e-07
  %v1988 = vrcp.pop %v1972
  %v1989 = vrcp.pop %v1973
  %v1990 = vrcp.pop %v1974
  %v1991 = vrcp.pop %v1975
  %v1992 = vrcp.pop %v1976
  %v1993 = vrcp.pop %v1977
  %v1994 = vrcp.pop %v1978
  %v1995 = vrcp.pop %v1979
  %v1996 = vrcp.pop %v1980
  %v1997 = vrcp.pop %v1981
  %v1998 = vrcp.pop %v1982
  %v1999 = vrcp.pop %v1983
  %v2000 = vrcp.pop %v1984
  %v2001 = vrcp.pop %v1985
  %v2002 = vrcp.pop %v1986
  %v2003 = vrcp.pop %v1987
  %v2004 = vsel %vm1956, %v1988, 1.0
  %v2005 = vsel %vm1957, %v1989, 1.0
  %v2006 = vsel %vm1958, %v1990, 1.0
  %v2007 = vsel %vm1959, %v1991, 1.0
  %v2008 = vsel %vm1960, %v1992, 1.0
  %v2009 = vsel %vm1961, %v1993, 1.0
  %v2010 = vsel %vm1962, %v1994, 1.0
  %v2011 = vsel %vm1963, %v1995, 1.0
  %v2012 = vsel %vm1964, %v1996, 1.0
  %v2013 = vsel %vm1965, %v1997, 1.0
  %v2014 = vsel %vm1966, %v1998, 1.0
  %v2015 = vsel %vm1967, %v1999, 1.0
  %v2016 = vsel %vm1968, %v2000, 1.0
  %v2017 = vsel %vm1969, %v2001, 1.0
  %v2018 = vsel %vm1970, %v2002, 1.0
  %v2019 = vsel %vm1971, %v2003, 1.0
  %v2020 = vmul.f32 %v1638, %v2004
  %v2021 = vmul.f32 %v1640, %v2004
  %v2022 = vmul.f32 %v1645, %v2005
  %v2023 = vmul.f32 %v1647, %v2005
  %v2024 = vmul.f32 %v1652, %v2006
  %v2025 = vmul.f32 %v1654, %v2006
  %v2026 = vmul.f32 %v1659, %v2007
  %v2027 = vmul.f32 %v1661, %v2007
  %v2028 = vmul.f32 %v1666, %v2008
  %v2029 = vmul.f32 %v1668, %v2008
  %v2030 = vmul.f32 %v1673, %v2009
  %v2031 = vmul.f32 %v1675, %v2009
  %v2032 = vmul.f32 %v1680, %v2010
  %v2033 = vmul.f32 %v1682, %v2010
  %v2034 = vmul.f32 %v1687, %v2011
  %v2035 = vmul.f32 %v1689, %v2011
  %v2036 = vmul.f32 %v1694, %v2012
  %v2037 = vmul.f32 %v1696, %v2012
  %v2038 = vmul.f32 %v1701, %v2013
  %v2039 = vmul.f32 %v1703, %v2013
  %v2040 = vmul.f32 %v1708, %v2014
  %v2041 = vmul.f32 %v1710, %v2014
  %v2042 = vmul.f32 %v1715, %v2015
  %v2043 = vmul.f32 %v1717, %v2015
  %v2044 = vmul.f32 %v1722, %v2016
  %v2045 = vmul.f32 %v1724, %v2016
  %v2046 = vmul.f32 %v1729, %v2017
  %v2047 = vmul.f32 %v1731, %v2017
  %v2048 = vmul.f32 %v1736, %v2018
  %v2049 = vmul.f32 %v1738, %v2018
  %v2050 = vmul.f32 %v1743, %v2019
  %v2051 = vmul.f32 %v1745, %v2019
  %2052 = vst [vmem:[%s2] sm:$0xff] %v2020
  %2053 = vst.msk [vmem:[%s2 + $0x8] sm:$0xff] %vm1779, %v2021
  %2054 = vst [vmem:[%s2 + $0x10] sm:$0xff] %v2022
  %2055 = vst.msk [vmem:[%s2 + $0x18] sm:$0xff] %vm1779, %v2023
  %2056 = vst [vmem:[%s2 + $0x20] sm:$0xff] %v2024
  %2057 = vst.msk [vmem:[%s2 + $0x28] sm:$0xff] %vm1779, %v2025
  %2058 = vst [vmem:[%s2 + $0x30] sm:$0xff] %v2026
  %2059 = vst.msk [vmem:[%s2 + $0x38] sm:$0xff] %vm1779, %v2027
  %2060 = vst [vmem:[%s2 + $0x40] sm:$0xff] %v2028
  %2061 = vst.msk [vmem:[%s2 + $0x48] sm:$0xff] %vm1779, %v2029
  %2062 = vst [vmem:[%s2 + $0x50] sm:$0xff] %v2030
  %2063 = vst.msk [vmem:[%s2 + $0x58] sm:$0xff] %vm1779, %v2031
  %2064 = vst [vmem:[%s2 + $0x60] sm:$0xff] %v2032
  %2065 = vst.msk [vmem:[%s2 + $0x68] sm:$0xff] %vm1779, %v2033
  %2066 = vst [vmem:[%s2 + $0x70] sm:$0xff] %v2034
  %2067 = vst.msk [vmem:[%s2 + $0x78] sm:$0xff] %vm1779, %v2035
  %2068 = vst [vmem:[%s2 + $0x80] sm:$0xff] %v2036
  %2069 = vst.msk [vmem:[%s2 + $0x88] sm:$0xff] %vm1779, %v2037
  %2070 = vst [vmem:[%s2 + $0x90] sm:$0xff] %v2038
  %2071 = vst.msk [vmem:[%s2 + $0x98] sm:$0xff] %vm1779, %v2039
  %2072 = vst [vmem:[%s2 + $0xa0] sm:$0xff] %v2040
  %2073 = vst.msk [vmem:[%s2 + $0xa8] sm:$0xff] %vm1779, %v2041
  %2074 = vst [vmem:[%s2 + $0xb0] sm:$0xff] %v2042
  %2075 = vst.msk [vmem:[%s2 + $0xb8] sm:$0xff] %vm1779, %v2043
  %2076 = vst [vmem:[%s2 + $0xc0] sm:$0xff] %v2044
  %2077 = vst.msk [vmem:[%s2 + $0xc8] sm:$0xff] %vm1779, %v2045
  %2078 = vst [vmem:[%s2 + $0xd0] sm:$0xff] %v2046
  %2079 = vst.msk [vmem:[%s2 + $0xd8] sm:$0xff] %vm1779, %v2047
  %2080 = vst [vmem:[%s2 + $0xe0] sm:$0xff] %v2048
  %2081 = vst.msk [vmem:[%s2 + $0xe8] sm:$0xff] %vm1779, %v2049
  %2082 = vst [vmem:[%s2 + $0xf0] sm:$0xff] %v2050
  %2083 = vst.msk [vmem:[%s2 + $0xf8] sm:$0xff] %vm1779, %v2051
  // Predicated region
  $region10: #{tpu_custom_call.1} parent=0 // pred_check
    _
  $region11: #{tpu_custom_call.1} parent=0 // pred_check_branch
    %2085 = sbr.rel (0) target = $region13
  $region12: #{tpu_custom_call.1} parent=0 // pred_region
    _
  $region13: #{tpu_custom_call.1} parent=0 // pred_fallthru
    _
  // Predicated region
  $region14: #{tpu_custom_call.1} parent=0 // pred_check
    _
  $region15: #{tpu_custom_call.1} parent=0 // pred_check_branch
    %2087 = sbr.rel (0) target = $region17
  $region16: #{tpu_custom_call.1} parent=0 // pred_region
    _
  $region17: #{tpu_custom_call.1} parent=0 // pred_fallthru
    _

</llo_original>
